<compile_context>
chip_gen: v5e
topology: v5e:2x2
jax: 0.10.0
libtpu: 0.0.40
codegen_flags: <defaults>
</compile_context>

<pallas_src>
import functools
import math

import jax
import jax.numpy as jnp
from jax.experimental import pallas as pl
from jax.experimental.pallas import tpu as pltpu

# Scoped-VMEM budget: 32 MiB is safe on every generation (v7x has only 64 MiB
# physical per TensorCore; v5e/v6e have 128 MiB so this is conservative there).
_VMEM_LIMIT_BYTES = 32 * 1024 * 1024


# ---------------------------------------------------------------------------
# Tile pickers: always return an exact divisor of `dim` (aligned when possible)
# instead of the old "fall back to the full dimension for any ragged size".
# ---------------------------------------------------------------------------
def _row_tile(dim, pref=256):
    """Largest sublane-aligned (multiple of 8) divisor of `dim` <= pref."""
    if dim <= pref:
        return dim
    t = (pref // 8) * 8
    while t >= 8:
        if dim % t == 0:
            return t
        t -= 8
    return dim  # no aligned divisor: single block (fine for small dims)


def _lane_tile(dim, pref=512):
    """Largest lane-aligned (multiple of 128) divisor of `dim` <= pref."""
    if dim <= pref:
        return dim
    t = (pref // 128) * 128
    while t >= 128:
        if dim % t == 0:
            return t
        t -= 128
    return dim


# ---------------------------------------------------------------------------
# LayerNormalization on fp32 *values* (used inside fused kernels).
# torch semantics: unbiased std (ddof = 1), eps added to the std (not the var).
# ---------------------------------------------------------------------------
def _layer_norm_f32(x, alpha, beta, eps):
    f = x.shape[-1]
    mean = jnp.sum(x, axis=-1, keepdims=True) * (1.0 / f)
    c = x - mean
    var = jnp.sum(c * c, axis=-1, keepdims=True) * (1.0 / (f - 1))
    std = jnp.sqrt(var)
    return alpha * (c / (std + eps)) + beta      # exact divide (no approx rcp)


# ---------------------------------------------------------------------------
# Kernel 1: fused LayerNorm -> matmul (used for LN1 + packed QKV projection)
# ---------------------------------------------------------------------------
def _ln_matmul_kernel(x_ref, alpha_ref, beta_ref, w_ref, o_ref, xn_ref, *,
                      eps, dot_dtype):
    # Grid = (M tiles, N tiles).  The x tile and its normalized version stay
    # VMEM-resident across the inner N axis, so LN never touches HBM.
    @pl.when(pl.program_id(1) == 0)
    def _():
        x = x_ref[...].astype(jnp.float32)
        xn_ref[...] = _layer_norm_f32(
            x, alpha_ref[...].astype(jnp.float32),
            beta_ref[...].astype(jnp.float32), eps)

    o_ref[...] = jnp.dot(
        xn_ref[...].astype(dot_dtype), w_ref[...].astype(dot_dtype),
        preferred_element_type=jnp.float32).astype(o_ref.dtype)


def ln_matmul(x2, alpha, beta, w, *, eps, dot_dtype=None,
              tm_pref=256, tn_pref=512):
    """y = LayerNorm(x2) @ w.  x2: (M, K); w: (K, N) (in_features, out_features)."""
    M, K = x2.shape
    K2, N = w.shape
    assert K == K2 and K >= 2
    dot_dtype = dot_dtype or x2.dtype
    tm = _row_tile(M, tm_pref)
    tn = _lane_tile(N, tn_pref)
    grid = (M // tm, N // tn)
    # K (= d_model) is kept un-tiled: a (tm, K) fp32 tile is <= 4 MiB for
    # K <= 4096 at tm = 256 and is needed whole for the LayerNorm reduction.

    return pl.pallas_call(
        functools.partial(_ln_matmul_kernel, eps=eps, dot_dtype=dot_dtype),
        out_shape=jax.ShapeDtypeStruct((M, N), x2.dtype),
        grid_spec=pltpu.PrefetchScalarGridSpec(
            num_scalar_prefetch=0,
            grid=grid,
            in_specs=[
                pl.BlockSpec((tm, K), lambda i, j: (i, 0)),
                pl.BlockSpec((1, K), lambda i, j: (0, 0)),
                pl.BlockSpec((1, K), lambda i, j: (0, 0)),
                pl.BlockSpec((K, tn), lambda i, j: (0, j)),
            ],
            out_specs=pl.BlockSpec((tm, tn), lambda i, j: (i, j)),
            scratch_shapes=[pltpu.VMEM((tm, K), jnp.float32)],
        ),
        compiler_params=pltpu.CompilerParams(
            dimension_semantics=("parallel", "arbitrary"),
            vmem_limit_bytes=_VMEM_LIMIT_BYTES,
        ),
    )(x2, alpha.reshape(1, K), beta.reshape(1, K), w)


# ---------------------------------------------------------------------------
# Kernel 2: multi-head attention + output projection + residual add.
# Heads are lane slices of the packed (S, 3*D) QKV block -> no host-side
# split/merge transposes; output is written directly in (B, S, D) layout.
# ---------------------------------------------------------------------------
def _attention_wo_kernel(qkv_ref, mask_ref, wo_ref, xres_ref, o_ref, *,
                         h, d_k, sm_scale, dot_dtype):
    d = h * d_k
    qkv = qkv_ref[...]                          # (S, 3*D)
    mask = mask_ref[...]                        # (S, S)
    out = xres_ref[...].astype(jnp.float32)     # residual, fp32 accumulator

    for head in range(h):                       # static unroll over heads
        lo = head * d_k
        q_h = qkv[:, lo:lo + d_k].astype(dot_dtype)
        k_h = qkv[:, d + lo:d + lo + d_k].astype(dot_dtype)
        v_h = qkv[:, 2 * d + lo:2 * d + lo + d_k].astype(dot_dtype)
        # q @ k^T via transposed-RHS dot_general (no materialized transpose).
        s = jax.lax.dot_general(q_h, k_h, (((1,), (1,)), ((), ())),
                                preferred_element_type=jnp.float32) * sm_scale
        s = jnp.where(mask == 0, jnp.float32(-1e9), s)
        s = s - jnp.max(s, axis=-1, keepdims=True)
        p = jnp.exp(s)
        p = p / jnp.sum(p, axis=-1, keepdims=True)      # exact divide, fp32
        o_h = jnp.dot(p.astype(dot_dtype), v_h,
                      preferred_element_type=jnp.float32)
        # Fused W_o projection: sum_h  o_h @ W_o[h*d_k:(h+1)*d_k, :]
        out = out + jnp.dot(o_h.astype(dot_dtype),
                            wo_ref[lo:lo + d_k, :].astype(dot_dtype),
                            preferred_element_type=jnp.float32)

    o_ref[...] = out.astype(o_ref.dtype)


def attention_block(qkv, mask, w_o, x_res, *, h, sm_scale, dot_dtype=None):
    """x_res + MHA(qkv, mask) @ w_o, one pallas_call over a (batch,) grid.
    qkv: (B, S, 3*D) packed [q | k | v]; mask: (B, 1, S, S); w_o: (D, D).

    TODO(synk): for long sequences, replace the in-kernel (S, S) score matrix
    with a KV-tiled flash-attention grid axis (online softmax m/l/acc scratch).
    """
    B, S, threeD = qkv.shape
    D = threeD // 3
    d_k = D // h
    dot_dtype = dot_dtype or x_res.dtype
    assert mask.shape == (B, 1, S, S)
    assert w_o.shape == (D, D)
    assert x_res.shape == (B, S, D)

    return pl.pallas_call(
        functools.partial(_attention_wo_kernel, h=h, d_k=d_k,
                          sm_scale=sm_scale, dot_dtype=dot_dtype),
        out_shape=jax.ShapeDtypeStruct((B, S, D), x_res.dtype),
        grid_spec=pltpu.PrefetchScalarGridSpec(
            num_scalar_prefetch=0,
            grid=(B,),
            in_specs=[
                pl.BlockSpec((None, S, threeD), lambda b: (b, 0, 0)),
                pl.BlockSpec((None, None, S, S), lambda b: (b, 0, 0, 0)),
                pl.BlockSpec((D, D), lambda b: (0, 0)),
                pl.BlockSpec((None, S, D), lambda b: (b, 0, 0)),
            ],
            out_specs=pl.BlockSpec((None, S, D), lambda b: (b, 0, 0)),
        ),
        compiler_params=pltpu.CompilerParams(
            dimension_semantics=("parallel",),
            vmem_limit_bytes=_VMEM_LIMIT_BYTES,
        ),
    )(qkv, mask, w_o, x_res)


# ---------------------------------------------------------------------------
# Kernel 3: fused LayerNorm -> Linear1 -> ReLU -> Linear2 -> (+bias, +residual)
# The (M, D_FF) hidden activation never touches HBM.
# ---------------------------------------------------------------------------
def _ln_ffn_kernel(x_ref, alpha_ref, beta_ref, w1_ref, b1_ref, w2_ref, b2_ref,
                   o_ref, xn_ref, acc_ref, *, eps, dot_dtype):
    j = pl.program_id(1)        # inner axis: D_FF chunks (reduction/accumulate)

    @pl.when(j == 0)
    def _():
        x = x_ref[...].astype(jnp.float32)
        xn_ref[...] = _layer_norm_f32(
            x, alpha_ref[...].astype(jnp.float32),
            beta_ref[...].astype(jnp.float32), eps)
        acc_ref[...] = jnp.zeros_like(acc_ref)

    hmid = jnp.dot(xn_ref[...].astype(dot_dtype), w1_ref[...].astype(dot_dtype),
                   preferred_element_type=jnp.float32)
    hmid = jnp.maximum(hmid + b1_ref[...].astype(jnp.float32), 0.0)
    acc_ref[...] += jnp.dot(hmid.astype(dot_dtype), w2_ref[...].astype(dot_dtype),
                            preferred_element_type=jnp.float32)

    @pl.when(j == pl.num_programs(1) - 1)
    def _():
        y = (acc_ref[...] + b2_ref[...].astype(jnp.float32)
             + x_ref[...].astype(jnp.float32))           # fused residual add
        o_ref[...] = y.astype(o_ref.dtype)


def ln_ffn(x2, alpha, beta, w1, b1, w2, b2, *, eps, dot_dtype=None,
           tm_pref=256, tf_pref=512):
    """y = x2 + Linear2(relu(Linear1(LayerNorm(x2)))) as a single kernel."""
    M, D = x2.shape
    D1, F = w1.shape
    F2, D2 = w2.shape
    assert D == D1 and D == D2 and F == F2 and D >= 2
    dot_dtype = dot_dtype or x2.dtype
    tm = _row_tile(M, tm_pref)
    tf = _lane_tile(F, tf_pref)
    grid = (M // tm, F // tf)

    return pl.pallas_call(
        functools.partial(_ln_ffn_kernel, eps=eps, dot_dtype=dot_dtype),
        out_shape=jax.ShapeDtypeStruct((M, D), x2.dtype),
        grid_spec=pltpu.PrefetchScalarGridSpec(
            num_scalar_prefetch=0,
            grid=grid,
            in_specs=[
                pl.BlockSpec((tm, D), lambda i, j: (i, 0)),   # x (LN + residual)
                pl.BlockSpec((1, D), lambda i, j: (0, 0)),    # ln alpha
                pl.BlockSpec((1, D), lambda i, j: (0, 0)),    # ln bias
                pl.BlockSpec((D, tf), lambda i, j: (0, j)),   # w1 chunk
                pl.BlockSpec((1, tf), lambda i, j: (0, j)),   # b1 chunk
                pl.BlockSpec((tf, D), lambda i, j: (j, 0)),   # w2 chunk
                pl.BlockSpec((1, D), lambda i, j: (0, 0)),    # b2
            ],
            out_specs=pl.BlockSpec((tm, D), lambda i, j: (i, 0)),
            scratch_shapes=[pltpu.VMEM((tm, D), jnp.float32),   # LN(x) tile
                            pltpu.VMEM((tm, D), jnp.float32)],  # fp32 accum
        ),
        compiler_params=pltpu.CompilerParams(
            dimension_semantics=("parallel", "arbitrary"),
            vmem_limit_bytes=_VMEM_LIMIT_BYTES,
        ),
    )(x2, alpha.reshape(1, D), beta.reshape(1, D), w1, b1.reshape(1, F),
      w2, b2.reshape(1, D))


# ---------------------------------------------------------------------------
# EncoderBlock forward (pre-norm residual connections, dropout == identity)
# ---------------------------------------------------------------------------
def encoder_block_forward(x, src_mask, params, *, h, eps=1e-6, dot_dtype=None):
    # TODO(synk): dropout is treated as identity (p=0 / eval mode).
    B, S, D = x.shape
    assert D % h == 0
    d_k = D // h
    x2 = x.reshape(B * S, D)

    # --- residual connection 0: LN1 -> QKV (one wide matmul) -> attention
    #     -> W_o -> +x (attention kernel fuses W_o projection + residual) ----
    w_qkv = jnp.concatenate([params["w_q"], params["w_k"], params["w_v"]],
                            axis=1)                              # (D, 3D)
    qkv = ln_matmul(x2, params["ln1_alpha"], params["ln1_bias"], w_qkv,
                    eps=eps, dot_dtype=dot_dtype)                # (B*S, 3D)
    qkv = qkv.reshape(B, S, 3 * D)                               # free reshape

    x = attention_block(qkv, src_mask, params["w_o"], x, h=h,
                        sm_scale=1.0 / math.sqrt(d_k),
                        dot_dtype=dot_dtype)                     # (B, S, D)

    # --- residual connection 1: LN2 -> W1 -> ReLU -> W2 -> +x (one kernel) ---
    out = ln_ffn(x.reshape(B * S, D), params["ln2_alpha"], params["ln2_bias"],
                 params["w1"], params["b1"], params["w2"], params["b2"],
                 eps=eps, dot_dtype=dot_dtype)                   # (B*S, D)
    return out.reshape(B, S, D)


# ---------------------------------------------------------------------------
# Pure-JAX reference (mirrors the PyTorch module, dropout == identity)
# ---------------------------------------------------------------------------
def _reference_encoder_block(x, src_mask, params, *, h, eps=1e-6):
    def ln(t, a, b):
        mean = jnp.mean(t, axis=-1, keepdims=True)
        std = jnp.std(t, axis=-1, keepdims=True, ddof=1)
        return a * ((t - mean) / (std + eps)) + b

    B, S, D = x.shape
    d_k = D // h

    def mha(t):
        q = t @ params["w_q"]
        k = t @ params["w_k"]
        v = t @ params["w_v"]

        def split(u):
            return u.reshape(B, S, h, d_k).transpose(0, 2, 1, 3)

        q, k, v = split(q), split(k), split(v)
        s = (q @ jnp.swapaxes(k, -1, -2)) / math.sqrt(d_k)
        s = jnp.where(src_mask == 0, -1e9, s)
        p = jax.nn.softmax(s, axis=-1)
        o = (p @ v).transpose(0, 2, 1, 3).reshape(B, S, D)
        return o @ params["w_o"]

    def ffn(t):
        hmid = jnp.maximum(t @ params["w1"] + params["b1"], 0.0)
        return hmid @ params["w2"] + params["b2"]

    x = x + mha(ln(x, params["ln1_alpha"], params["ln1_bias"]))
    x = x + ffn(ln(x, params["ln2_alpha"], params["ln2_bias"]))
    return x


if __name__ == "__main__":
    key = jax.random.PRNGKey(0)
    B, S, D, H, D_FF = 2, 8, 32, 4, 64
    keys = jax.random.split(key, 8)

    x = jax.random.normal(keys[0], (B, S, D), dtype=jnp.float32)

    # Key-padding mask: batch 0 fully valid, batch 1 has its last 2 keys masked.
    lengths = jnp.array([S, S - 2])
    key_valid = (jnp.arange(S)[None, :] < lengths[:, None]).astype(jnp.float32)
    src_mask = jnp.broadcast_to(key_valid[:, None, None, :], (B, 1, S, S))

    scale_d = 1.0 / math.sqrt(D)
    scale_ff = 1.0 / math.sqrt(D_FF)
    params = {
        "ln1_alpha": jnp.ones((D,), jnp.float32),
        "ln1_bias": jnp.zeros((D,), jnp.float32),
        "ln2_alpha": jnp.ones((D,), jnp.float32),
        "ln2_bias": jnp.zeros((D,), jnp.float32),
        # weights stored as (in_features, out_features)
        "w_q": jax.random.normal(keys[1], (D, D), jnp.float32) * scale_d,
        "w_k": jax.random.normal(keys[2], (D, D), jnp.float32) * scale_d,
        "w_v": jax.random.normal(keys[3], (D, D), jnp.float32) * scale_d,
        "w_o": jax.random.normal(keys[4], (D, D), jnp.float32) * scale_d,
        "w1": jax.random.normal(keys[5], (D, D_FF), jnp.float32) * scale_d,
        "b1": jnp.zeros((D_FF,), jnp.float32),
        "w2": jax.random.normal(keys[6], (D_FF, D), jnp.float32) * scale_ff,
        "b2": jnp.zeros((D,), jnp.float32),
    }

    # fp32 demo run (use dot_dtype=jnp.bfloat16 for MXU peak on v6e/v7x).
    encoder_fwd = jax.jit(functools.partial(encoder_block_forward, h=H, eps=1e-6))
    y = jax.block_until_ready(encoder_fwd(x, src_mask, params))

    ref = _reference_encoder_block(x, src_mask, params, h=H, eps=1e-6)
    assert y.shape == x.shape
    max_err = float(jnp.max(jnp.abs(y - ref)))
    assert jnp.allclose(y, ref, atol=2e-2, rtol=2e-2), max_err

    print("KERNEL_OK")
</pallas_src>

<mosaic_0001>
module attributes {stable_mosaic.version = 11 : i64} {
  func.func @_ln_matmul_kernel(%arg0: i32, %arg1: i32, %arg2: memref<16x32xf32, #tpu.memory_space<vmem>>, %arg3: memref<1x32xf32, #tpu.memory_space<vmem>>, %arg4: memref<1x32xf32, #tpu.memory_space<vmem>>, %arg5: memref<32x96xf32, #tpu.memory_space<vmem>>, %arg6: memref<16x96xf32, #tpu.memory_space<vmem>>, %arg7: memref<16x32xf32, #tpu.memory_space<vmem>>) attributes {dimension_semantics = [#tpu.dimension_semantics<parallel>, #tpu.dimension_semantics<arbitrary>], iteration_bounds = array<i64: 1, 1>, scalar_prefetch = 0 : i64, scratch_operands = 1 : i64, tpu.core_type = #tpu.core_type<tc>, window_params = [{transform_indices = @transform_0, window_bounds = array<i64: 16, 32>}, {pipeline_mode = #tpu.pipeline_mode<synchronous>, transform_indices = @transform_1, window_bounds = array<i64: 1, 32>}, {pipeline_mode = #tpu.pipeline_mode<synchronous>, transform_indices = @transform_2, window_bounds = array<i64: 1, 32>}, {transform_indices = @transform_3, window_bounds = array<i64: 32, 96>}, {transform_indices = @transform_4, window_bounds = array<i64: 16, 96>}]} {
    %c0_i32 = arith.constant 0 : i32
    %0 = arith.cmpi eq, %arg1, %c0_i32 : i32
    %1 = arith.extui %0 : i1 to i32
    %c0_i32_0 = arith.constant 0 : i32
    %2 = arith.cmpi ne, %1, %c0_i32_0 : i32
    scf.if %2 {
      %c0_6 = arith.constant 0 : index
      %c0_7 = arith.constant 0 : index
      %7 = vector.load %arg2[%c0_6, %c0_7] : memref<16x32xf32, #tpu.memory_space<vmem>>, vector<16x32xf32>
      %c0_8 = arith.constant 0 : index
      %c0_9 = arith.constant 0 : index
      %8 = vector.load %arg3[%c0_8, %c0_9] : memref<1x32xf32, #tpu.memory_space<vmem>>, vector<1x32xf32>
      %c0_10 = arith.constant 0 : index
      %c0_11 = arith.constant 0 : index
      %9 = vector.load %arg4[%c0_10, %c0_11] : memref<1x32xf32, #tpu.memory_space<vmem>>, vector<1x32xf32>
      %cst_12 = arith.constant dense<0.000000e+00> : vector<16xf32>
      %10 = vector.multi_reduction <add>, %7, %cst_12 [1] : vector<16x32xf32> to vector<16xf32>
      %11 = vector.shape_cast %10 : vector<16xf32> to vector<16x1xf32>
      %cst_13 = arith.constant 3.125000e-02 : f32
      %12 = vector.broadcast %cst_13 : f32 to vector<16x1xf32>
      %13 = arith.mulf %11, %12 : vector<16x1xf32>
      %14 = vector.broadcast %13 : vector<16x1xf32> to vector<16x32xf32>
      %15 = arith.subf %7, %14 : vector<16x32xf32>
      %16 = arith.mulf %15, %15 : vector<16x32xf32>
      %cst_14 = arith.constant dense<0.000000e+00> : vector<16xf32>
      %17 = vector.multi_reduction <add>, %16, %cst_14 [1] : vector<16x32xf32> to vector<16xf32>
      %18 = vector.shape_cast %17 : vector<16xf32> to vector<16x1xf32>
      %cst_15 = arith.constant 0.0322580636 : f32
      %19 = vector.broadcast %cst_15 : f32 to vector<16x1xf32>
      %20 = arith.mulf %18, %19 : vector<16x1xf32>
      %21 = math.sqrt %20 : vector<16x1xf32>
      %cst_16 = arith.constant 9.99999997E-7 : f32
      %22 = vector.broadcast %cst_16 : f32 to vector<16x1xf32>
      %23 = arith.addf %21, %22 : vector<16x1xf32>
      %24 = vector.broadcast %23 : vector<16x1xf32> to vector<16x32xf32>
      %25 = arith.divf %15, %24 : vector<16x32xf32>
      %26 = vector.broadcast %8 : vector<1x32xf32> to vector<16x32xf32>
      %27 = arith.mulf %26, %25 : vector<16x32xf32>
      %28 = vector.broadcast %9 : vector<1x32xf32> to vector<16x32xf32>
      %29 = arith.addf %27, %28 : vector<16x32xf32>
      %c0_17 = arith.constant 0 : index
      %c0_18 = arith.constant 0 : index
      %30 = vector.load %arg7[%c0_17, %c0_18] : memref<16x32xf32, #tpu.memory_space<vmem>>, vector<16x32xf32>
      tpu.vector_store %arg7[%c0_17, %c0_18], %29 {strides = array<i32>} : memref<16x32xf32, #tpu.memory_space<vmem>>, vector<16x32xf32>,
    } else {
    }
    %c0 = arith.constant 0 : index
    %c0_1 = arith.constant 0 : index
    %3 = vector.load %arg7[%c0, %c0_1] : memref<16x32xf32, #tpu.memory_space<vmem>>, vector<16x32xf32>
    %c0_2 = arith.constant 0 : index
    %c0_3 = arith.constant 0 : index
    %4 = vector.load %arg5[%c0_2, %c0_3] : memref<32x96xf32, #tpu.memory_space<vmem>>, vector<32x96xf32>
    %cst = arith.constant dense<0.000000e+00> : vector<16x96xf32>
    %5 = tpu.matmul %3, %4, %cst {dimension_numbers = #tpu.dot_dimension_numbers<[1], [0], [0], [1], [0, 0, 1, 1], [], []>} : vector<16x32xf32>, vector<32x96xf32>, vector<16x96xf32> -> vector<16x96xf32>
    %c0_4 = arith.constant 0 : index
    %c0_5 = arith.constant 0 : index
    %6 = vector.load %arg6[%c0_4, %c0_5] : memref<16x96xf32, #tpu.memory_space<vmem>>, vector<16x96xf32>
    tpu.vector_store %arg6[%c0_4, %c0_5], %5 {strides = array<i32>} : memref<16x96xf32, #tpu.memory_space<vmem>>, vector<16x96xf32>,
    return
  }
  func.func @transform_0(%arg0: i32, %arg1: i32) -> (i32, i32) {
    %c0_i32 = arith.constant 0 : i32
    %c0_i32_0 = arith.constant 0 : i32
    return %arg0, %c0_i32 : i32, i32
  }
  func.func @transform_1(%arg0: i32, %arg1: i32) -> (i32, i32) {
    %c0_i32 = arith.constant 0 : i32
    %c0_i32_0 = arith.constant 0 : i32
    %c0_i32_1 = arith.constant 0 : i32
    return %c0_i32, %c0_i32_0 : i32, i32
  }
  func.func @transform_2(%arg0: i32, %arg1: i32) -> (i32, i32) {
    %c0_i32 = arith.constant 0 : i32
    %c0_i32_0 = arith.constant 0 : i32
    %c0_i32_1 = arith.constant 0 : i32
    return %c0_i32, %c0_i32_0 : i32, i32
  }
  func.func @transform_3(%arg0: i32, %arg1: i32) -> (i32, i32) {
    %c0_i32 = arith.constant 0 : i32
    %c0_i32_0 = arith.constant 0 : i32
    return %c0_i32, %arg1 : i32, i32
  }
  func.func @transform_4(%arg0: i32, %arg1: i32) -> (i32, i32) {
    %c0_i32 = arith.constant 0 : i32
    return %arg0, %arg1 : i32, i32
  }
}

module attributes {stable_mosaic.version = 11 : i64} {
  func.func @_attention_wo_kernel(%arg0: i32, %arg1: memref<1x8x96xf32, #tpu.memory_space<vmem>>, %arg2: memref<1x1x8x8xf32, #tpu.memory_space<vmem>>, %arg3: memref<32x32xf32, #tpu.memory_space<vmem>>, %arg4: memref<1x8x32xf32, #tpu.memory_space<vmem>>, %arg5: memref<1x8x32xf32, #tpu.memory_space<vmem>>) attributes {dimension_semantics = [#tpu.dimension_semantics<parallel>], iteration_bounds = array<i64: 2>, scalar_prefetch = 0 : i64, scratch_operands = 0 : i64, tpu.core_type = #tpu.core_type<tc>, window_params = [{transform_indices = @transform_0, window_bounds = array<i64: 1, 8, 96>}, {transform_indices = @transform_1, window_bounds = array<i64: 1, 1, 8, 8>}, {pipeline_mode = #tpu.pipeline_mode<synchronous>, transform_indices = @transform_2, window_bounds = array<i64: 32, 32>}, {transform_indices = @transform_3, window_bounds = array<i64: 1, 8, 32>}, {transform_indices = @transform_4, window_bounds = array<i64: 1, 8, 32>}]} {
    %c0 = arith.constant 0 : index
    %c0_0 = arith.constant 0 : index
    %c0_1 = arith.constant 0 : index
    %0 = vector.load %arg1[%c0, %c0_0, %c0_1] : memref<1x8x96xf32, #tpu.memory_space<vmem>>, vector<1x8x96xf32>
    %1 = vector.shape_cast %0 : vector<1x8x96xf32> to vector<8x96xf32>
    %c0_2 = arith.constant 0 : index
    %c0_3 = arith.constant 0 : index
    %c0_4 = arith.constant 0 : index
    %c0_5 = arith.constant 0 : index
    %2 = vector.load %arg2[%c0_2, %c0_3, %c0_4, %c0_5] : memref<1x1x8x8xf32, #tpu.memory_space<vmem>>, vector<1x1x8x8xf32>
    %3 = vector.shape_cast %2 : vector<1x1x8x8xf32> to vector<8x8xf32>
    %c0_6 = arith.constant 0 : index
    %c0_7 = arith.constant 0 : index
    %c0_8 = arith.constant 0 : index
    %4 = vector.load %arg4[%c0_6, %c0_7, %c0_8] : memref<1x8x32xf32, #tpu.memory_space<vmem>>, vector<1x8x32xf32>
    %5 = vector.shape_cast %4 : vector<1x8x32xf32> to vector<8x32xf32>
    %6 = vector.extract_strided_slice %1 {offsets = [0, 0], sizes = [8, 8], strides = [1, 1]} : vector<8x96xf32> to vector<8x8xf32>
    %7 = vector.extract_strided_slice %1 {offsets = [0, 32], sizes = [8, 8], strides = [1, 1]} : vector<8x96xf32> to vector<8x8xf32>
    %8 = vector.extract_strided_slice %1 {offsets = [0, 64], sizes = [8, 8], strides = [1, 1]} : vector<8x96xf32> to vector<8x8xf32>
    %cst = arith.constant dense<0.000000e+00> : vector<8x8xf32>
    %9 = tpu.matmul %6, %7, %cst {dimension_numbers = #tpu.dot_dimension_numbers<[1], [1], [0], [0], [0, 0, 1, 0], [], []>} : vector<8x8xf32>, vector<8x8xf32>, vector<8x8xf32> -> vector<8x8xf32>
    %cst_9 = arith.constant 0.353553385 : f32
    %10 = vector.broadcast %cst_9 : f32 to vector<8x8xf32>
    %11 = arith.mulf %9, %10 : vector<8x8xf32>
    %cst_10 = arith.constant 0.000000e+00 : f32
    %12 = vector.broadcast %cst_10 : f32 to vector<8x8xf32>
    %13 = arith.cmpf oeq, %3, %12 : vector<8x8xf32>
    %cst_11 = arith.constant -1.000000e+09 : f32
    %14 = vector.broadcast %cst_11 : f32 to vector<8x8xf32>
    %15 = arith.select %13, %14, %11 : vector<8x8xi1>, vector<8x8xf32>
    %cst_12 = arith.constant dense<0xFF800000> : vector<8xf32>
    %16 = vector.multi_reduction <maximumf>, %15, %cst_12 [1] : vector<8x8xf32> to vector<8xf32>
    %17 = vector.shape_cast %16 : vector<8xf32> to vector<8x1xf32>
    %18 = vector.broadcast %17 : vector<8x1xf32> to vector<8x8xf32>
    %19 = arith.subf %15, %18 : vector<8x8xf32>
    %20 = math.exp %19 : vector<8x8xf32>
    %cst_13 = arith.constant dense<0.000000e+00> : vector<8xf32>
    %21 = vector.multi_reduction <add>, %20, %cst_13 [1] : vector<8x8xf32> to vector<8xf32>
    %22 = vector.shape_cast %21 : vector<8xf32> to vector<8x1xf32>
    %23 = vector.broadcast %22 : vector<8x1xf32> to vector<8x8xf32>
    %24 = arith.divf %20, %23 : vector<8x8xf32>
    %cst_14 = arith.constant dense<0.000000e+00> : vector<8x8xf32>
    %25 = tpu.matmul %24, %8, %cst_14 {dimension_numbers = #tpu.dot_dimension_numbers<[1], [0], [0], [1], [0, 0, 1, 1], [], []>} : vector<8x8xf32>, vector<8x8xf32>, vector<8x8xf32> -> vector<8x8xf32>
    %c0_15 = arith.constant 0 : index
    %c0_16 = arith.constant 0 : index
    %26 = vector.load %arg3[%c0_15, %c0_16] : memref<32x32xf32, #tpu.memory_space<vmem>>, vector<8x32xf32>
    %cst_17 = arith.constant dense<0.000000e+00> : vector<8x32xf32>
    %27 = tpu.matmul %25, %26, %cst_17 {dimension_numbers = #tpu.dot_dimension_numbers<[1], [0], [0], [1], [0, 0, 1, 1], [], []>} : vector<8x8xf32>, vector<8x32xf32>, vector<8x32xf32> -> vector<8x32xf32>
    %28 = arith.addf %5, %27 : vector<8x32xf32>
    %29 = vector.extract_strided_slice %1 {offsets = [0, 8], sizes = [8, 8], strides = [1, 1]} : vector<8x96xf32> to vector<8x8xf32>
    %30 = vector.extract_strided_slice %1 {offsets = [0, 40], sizes = [8, 8], strides = [1, 1]} : vector<8x96xf32> to vector<8x8xf32>
    %31 = vector.extract_strided_slice %1 {offsets = [0, 72], sizes = [8, 8], strides = [1, 1]} : vector<8x96xf32> to vector<8x8xf32>
    %cst_18 = arith.constant dense<0.000000e+00> : vector<8x8xf32>
    %32 = tpu.matmul %29, %30, %cst_18 {dimension_numbers = #tpu.dot_dimension_numbers<[1], [1], [0], [0], [0, 0, 1, 0], [], []>} : vector<8x8xf32>, vector<8x8xf32>, vector<8x8xf32> -> vector<8x8xf32>
    %cst_19 = arith.constant 0.353553385 : f32
    %33 = vector.broadcast %cst_19 : f32 to vector<8x8xf32>
    %34 = arith.mulf %32, %33 : vector<8x8xf32>
    %cst_20 = arith.constant 0.000000e+00 : f32
    %35 = vector.broadcast %cst_20 : f32 to vector<8x8xf32>
    %36 = arith.cmpf oeq, %3, %35 : vector<8x8xf32>
    %cst_21 = arith.constant -1.000000e+09 : f32
    %37 = vector.broadcast %cst_21 : f32 to vector<8x8xf32>
    %38 = arith.select %36, %37, %34 : vector<8x8xi1>, vector<8x8xf32>
    %cst_22 = arith.constant dense<0xFF800000> : vector<8xf32>
    %39 = vector.multi_reduction <maximumf>, %38, %cst_22 [1] : vector<8x8xf32> to vector<8xf32>
    %40 = vector.shape_cast %39 : vector<8xf32> to vector<8x1xf32>
    %41 = vector.broadcast %40 : vector<8x1xf32> to vector<8x8xf32>
    %42 = arith.subf %38, %41 : vector<8x8xf32>
    %43 = math.exp %42 : vector<8x8xf32>
    %cst_23 = arith.constant dense<0.000000e+00> : vector<8xf32>
    %44 = vector.multi_reduction <add>, %43, %cst_23 [1] : vector<8x8xf32> to vector<8xf32>
    %45 = vector.shape_cast %44 : vector<8xf32> to vector<8x1xf32>
    %46 = vector.broadcast %45 : vector<8x1xf32> to vector<8x8xf32>
    %47 = arith.divf %43, %46 : vector<8x8xf32>
    %cst_24 = arith.constant dense<0.000000e+00> : vector<8x8xf32>
    %48 = tpu.matmul %47, %31, %cst_24 {dimension_numbers = #tpu.dot_dimension_numbers<[1], [0], [0], [1], [0, 0, 1, 1], [], []>} : vector<8x8xf32>, vector<8x8xf32>, vector<8x8xf32> -> vector<8x8xf32>
    %c8 = arith.constant 8 : index
    %c0_25 = arith.constant 0 : index
    %49 = vector.load %arg3[%c8, %c0_25] : memref<32x32xf32, #tpu.memory_space<vmem>>, vector<8x32xf32>
    %cst_26 = arith.constant dense<0.000000e+00> : vector<8x32xf32>
    %50 = tpu.matmul %48, %49, %cst_26 {dimension_numbers = #tpu.dot_dimension_numbers<[1], [0], [0], [1], [0, 0, 1, 1], [], []>} : vector<8x8xf32>, vector<8x32xf32>, vector<8x32xf32> -> vector<8x32xf32>
    %51 = arith.addf %28, %50 : vector<8x32xf32>
    %52 = vector.extract_strided_slice %1 {offsets = [0, 16], sizes = [8, 8], strides = [1, 1]} : vector<8x96xf32> to vector<8x8xf32>
    %53 = vector.extract_strided_slice %1 {offsets = [0, 48], sizes = [8, 8], strides = [1, 1]} : vector<8x96xf32> to vector<8x8xf32>
    %54 = vector.extract_strided_slice %1 {offsets = [0, 80], sizes = [8, 8], strides = [1, 1]} : vector<8x96xf32> to vector<8x8xf32>
    %cst_27 = arith.constant dense<0.000000e+00> : vector<8x8xf32>
    %55 = tpu.matmul %52, %53, %cst_27 {dimension_numbers = #tpu.dot_dimension_numbers<[1], [1], [0], [0], [0, 0, 1, 0], [], []>} : vector<8x8xf32>, vector<8x8xf32>, vector<8x8xf32> -> vector<8x8xf32>
    %cst_28 = arith.constant 0.353553385 : f32
    %56 = vector.broadcast %cst_28 : f32 to vector<8x8xf32>
    %57 = arith.mulf %55, %56 : vector<8x8xf32>
    %cst_29 = arith.constant 0.000000e+00 : f32
    %58 = vector.broadcast %cst_29 : f32 to vector<8x8xf32>
    %59 = arith.cmpf oeq, %3, %58 : vector<8x8xf32>
    %cst_30 = arith.constant -1.000000e+09 : f32
    %60 = vector.broadcast %cst_30 : f32 to vector<8x8xf32>
    %61 = arith.select %59, %60, %57 : vector<8x8xi1>, vector<8x8xf32>
    %cst_31 = arith.constant dense<0xFF800000> : vector<8xf32>
    %62 = vector.multi_reduction <maximumf>, %61, %cst_31 [1] : vector<8x8xf32> to vector<8xf32>
    %63 = vector.shape_cast %62 : vector<8xf32> to vector<8x1xf32>
    %64 = vector.broadcast %63 : vector<8x1xf32> to vector<8x8xf32>
    %65 = arith.subf %61, %64 : vector<8x8xf32>
    %66 = math.exp %65 : vector<8x8xf32>
    %cst_32 = arith.constant dense<0.000000e+00> : vector<8xf32>
    %67 = vector.multi_reduction <add>, %66, %cst_32 [1] : vector<8x8xf32> to vector<8xf32>
    %68 = vector.shape_cast %67 : vector<8xf32> to vector<8x1xf32>
    %69 = vector.broadcast %68 : vector<8x1xf32> to vector<8x8xf32>
    %70 = arith.divf %66, %69 : vector<8x8xf32>
    %cst_33 = arith.constant dense<0.000000e+00> : vector<8x8xf32>
    %71 = tpu.matmul %70, %54, %cst_33 {dimension_numbers = #tpu.dot_dimension_numbers<[1], [0], [0], [1], [0, 0, 1, 1], [], []>} : vector<8x8xf32>, vector<8x8xf32>, vector<8x8xf32> -> vector<8x8xf32>
    %c16 = arith.constant 16 : index
    %c0_34 = arith.constant 0 : index
    %72 = vector.load %arg3[%c16, %c0_34] : memref<32x32xf32, #tpu.memory_space<vmem>>, vector<8x32xf32>
    %cst_35 = arith.constant dense<0.000000e+00> : vector<8x32xf32>
    %73 = tpu.matmul %71, %72, %cst_35 {dimension_numbers = #tpu.dot_dimension_numbers<[1], [0], [0], [1], [0, 0, 1, 1], [], []>} : vector<8x8xf32>, vector<8x32xf32>, vector<8x32xf32> -> vector<8x32xf32>
    %74 = arith.addf %51, %73 : vector<8x32xf32>
    %75 = vector.extract_strided_slice %1 {offsets = [0, 24], sizes = [8, 8], strides = [1, 1]} : vector<8x96xf32> to vector<8x8xf32>
    %76 = vector.extract_strided_slice %1 {offsets = [0, 56], sizes = [8, 8], strides = [1, 1]} : vector<8x96xf32> to vector<8x8xf32>
    %77 = vector.extract_strided_slice %1 {offsets = [0, 88], sizes = [8, 8], strides = [1, 1]} : vector<8x96xf32> to vector<8x8xf32>
    %cst_36 = arith.constant dense<0.000000e+00> : vector<8x8xf32>
    %78 = tpu.matmul %75, %76, %cst_36 {dimension_numbers = #tpu.dot_dimension_numbers<[1], [1], [0], [0], [0, 0, 1, 0], [], []>} : vector<8x8xf32>, vector<8x8xf32>, vector<8x8xf32> -> vector<8x8xf32>
    %cst_37 = arith.constant 0.353553385 : f32
    %79 = vector.broadcast %cst_37 : f32 to vector<8x8xf32>
    %80 = arith.mulf %78, %79 : vector<8x8xf32>
    %cst_38 = arith.constant 0.000000e+00 : f32
    %81 = vector.broadcast %cst_38 : f32 to vector<8x8xf32>
    %82 = arith.cmpf oeq, %3, %81 : vector<8x8xf32>
    %cst_39 = arith.constant -1.000000e+09 : f32
    %83 = vector.broadcast %cst_39 : f32 to vector<8x8xf32>
    %84 = arith.select %82, %83, %80 : vector<8x8xi1>, vector<8x8xf32>
    %cst_40 = arith.constant dense<0xFF800000> : vector<8xf32>
    %85 = vector.multi_reduction <maximumf>, %84, %cst_40 [1] : vector<8x8xf32> to vector<8xf32>
    %86 = vector.shape_cast %85 : vector<8xf32> to vector<8x1xf32>
    %87 = vector.broadcast %86 : vector<8x1xf32> to vector<8x8xf32>
    %88 = arith.subf %84, %87 : vector<8x8xf32>
    %89 = math.exp %88 : vector<8x8xf32>
    %cst_41 = arith.constant dense<0.000000e+00> : vector<8xf32>
    %90 = vector.multi_reduction <add>, %89, %cst_41 [1] : vector<8x8xf32> to vector<8xf32>
    %91 = vector.shape_cast %90 : vector<8xf32> to vector<8x1xf32>
    %92 = vector.broadcast %91 : vector<8x1xf32> to vector<8x8xf32>
    %93 = arith.divf %89, %92 : vector<8x8xf32>
    %cst_42 = arith.constant dense<0.000000e+00> : vector<8x8xf32>
    %94 = tpu.matmul %93, %77, %cst_42 {dimension_numbers = #tpu.dot_dimension_numbers<[1], [0], [0], [1], [0, 0, 1, 1], [], []>} : vector<8x8xf32>, vector<8x8xf32>, vector<8x8xf32> -> vector<8x8xf32>
    %c24 = arith.constant 24 : index
    %c0_43 = arith.constant 0 : index
    %95 = vector.load %arg3[%c24, %c0_43] : memref<32x32xf32, #tpu.memory_space<vmem>>, vector<8x32xf32>
    %cst_44 = arith.constant dense<0.000000e+00> : vector<8x32xf32>
    %96 = tpu.matmul %94, %95, %cst_44 {dimension_numbers = #tpu.dot_dimension_numbers<[1], [0], [0], [1], [0, 0, 1, 1], [], []>} : vector<8x8xf32>, vector<8x32xf32>, vector<8x32xf32> -> vector<8x32xf32>
    %97 = arith.addf %74, %96 : vector<8x32xf32>
    %c0_45 = arith.constant 0 : index
    %c0_46 = arith.constant 0 : index
    %c0_47 = arith.constant 0 : index
    %98 = vector.load %arg5[%c0_45, %c0_46, %c0_47] : memref<1x8x32xf32, #tpu.memory_space<vmem>>, vector<1x8x32xf32>
    %99 = vector.shape_cast %98 : vector<1x8x32xf32> to vector<8x32xf32>
    %100 = vector.shape_cast %97 : vector<8x32xf32> to vector<1x8x32xf32>
    tpu.vector_store %arg5[%c0_45, %c0_46, %c0_47], %100 {strides = array<i32>} : memref<1x8x32xf32, #tpu.memory_space<vmem>>, vector<1x8x32xf32>,
    return
  }
  func.func @transform_0(%arg0: i32) -> (i32, i32, i32) {
    %c0_i32 = arith.constant 0 : i32
    %c0_i32_0 = arith.constant 0 : i32
    %c0_i32_1 = arith.constant 0 : i32
    return %arg0, %c0_i32, %c0_i32_0 : i32, i32, i32
  }
  func.func @transform_1(%arg0: i32) -> (i32, i32, i32, i32) {
    %c0_i32 = arith.constant 0 : i32
    %c0_i32_0 = arith.constant 0 : i32
    %c0_i32_1 = arith.constant 0 : i32
    %c0_i32_2 = arith.constant 0 : i32
    return %arg0, %c0_i32, %c0_i32_0, %c0_i32_1 : i32, i32, i32, i32
  }
  func.func @transform_2(%arg0: i32) -> (i32, i32) {
    %c0_i32 = arith.constant 0 : i32
    %c0_i32_0 = arith.constant 0 : i32
    %c0_i32_1 = arith.constant 0 : i32
    return %c0_i32, %c0_i32_0 : i32, i32
  }
  func.func @transform_3(%arg0: i32) -> (i32, i32, i32) {
    %c0_i32 = arith.constant 0 : i32
    %c0_i32_0 = arith.constant 0 : i32
    %c0_i32_1 = arith.constant 0 : i32
    return %arg0, %c0_i32, %c0_i32_0 : i32, i32, i32
  }
  func.func @transform_4(%arg0: i32) -> (i32, i32, i32) {
    %c0_i32 = arith.constant 0 : i32
    %c0_i32_0 = arith.constant 0 : i32
    %c0_i32_1 = arith.constant 0 : i32
    return %arg0, %c0_i32, %c0_i32_0 : i32, i32, i32
  }
}

module attributes {stable_mosaic.version = 11 : i64} {
  func.func @_ln_ffn_kernel(%arg0: i32, %arg1: i32, %arg2: memref<16x32xf32, #tpu.memory_space<vmem>>, %arg3: memref<1x32xf32, #tpu.memory_space<vmem>>, %arg4: memref<1x32xf32, #tpu.memory_space<vmem>>, %arg5: memref<32x64xf32, #tpu.memory_space<vmem>>, %arg6: memref<1x64xf32, #tpu.memory_space<vmem>>, %arg7: memref<64x32xf32, #tpu.memory_space<vmem>>, %arg8: memref<1x32xf32, #tpu.memory_space<vmem>>, %arg9: memref<16x32xf32, #tpu.memory_space<vmem>>, %arg10: memref<16x32xf32, #tpu.memory_space<vmem>>, %arg11: memref<16x32xf32, #tpu.memory_space<vmem>>) attributes {dimension_semantics = [#tpu.dimension_semantics<parallel>, #tpu.dimension_semantics<arbitrary>], iteration_bounds = array<i64: 1, 1>, scalar_prefetch = 0 : i64, scratch_operands = 2 : i64, tpu.core_type = #tpu.core_type<tc>, window_params = [{transform_indices = @transform_0, window_bounds = array<i64: 16, 32>}, {pipeline_mode = #tpu.pipeline_mode<synchronous>, transform_indices = @transform_1, window_bounds = array<i64: 1, 32>}, {pipeline_mode = #tpu.pipeline_mode<synchronous>, transform_indices = @transform_2, window_bounds = array<i64: 1, 32>}, {transform_indices = @transform_3, window_bounds = array<i64: 32, 64>}, {transform_indices = @transform_4, window_bounds = array<i64: 1, 64>}, {transform_indices = @transform_5, window_bounds = array<i64: 64, 32>}, {pipeline_mode = #tpu.pipeline_mode<synchronous>, transform_indices = @transform_6, window_bounds = array<i64: 1, 32>}, {transform_indices = @transform_7, window_bounds = array<i64: 16, 32>}]} {
    %c0_i32 = arith.constant 0 : i32
    %0 = arith.cmpi eq, %arg1, %c0_i32 : i32
    %1 = arith.extui %0 : i1 to i32
    %c0_i32_0 = arith.constant 0 : i32
    %2 = arith.cmpi ne, %1, %c0_i32_0 : i32
    scf.if %2 {
      %c0_16 = arith.constant 0 : index
      %c0_17 = arith.constant 0 : index
      %19 = vector.load %arg2[%c0_16, %c0_17] : memref<16x32xf32, #tpu.memory_space<vmem>>, vector<16x32xf32>
      %c0_18 = arith.constant 0 : index
      %c0_19 = arith.constant 0 : index
      %20 = vector.load %arg3[%c0_18, %c0_19] : memref<1x32xf32, #tpu.memory_space<vmem>>, vector<1x32xf32>
      %c0_20 = arith.constant 0 : index
      %c0_21 = arith.constant 0 : index
      %21 = vector.load %arg4[%c0_20, %c0_21] : memref<1x32xf32, #tpu.memory_space<vmem>>, vector<1x32xf32>
      %cst_22 = arith.constant dense<0.000000e+00> : vector<16xf32>
      %22 = vector.multi_reduction <add>, %19, %cst_22 [1] : vector<16x32xf32> to vector<16xf32>
      %23 = vector.shape_cast %22 : vector<16xf32> to vector<16x1xf32>
      %cst_23 = arith.constant 3.125000e-02 : f32
      %24 = vector.broadcast %cst_23 : f32 to vector<16x1xf32>
      %25 = arith.mulf %23, %24 : vector<16x1xf32>
      %26 = vector.broadcast %25 : vector<16x1xf32> to vector<16x32xf32>
      %27 = arith.subf %19, %26 : vector<16x32xf32>
      %28 = arith.mulf %27, %27 : vector<16x32xf32>
      %cst_24 = arith.constant dense<0.000000e+00> : vector<16xf32>
      %29 = vector.multi_reduction <add>, %28, %cst_24 [1] : vector<16x32xf32> to vector<16xf32>
      %30 = vector.shape_cast %29 : vector<16xf32> to vector<16x1xf32>
      %cst_25 = arith.constant 0.0322580636 : f32
      %31 = vector.broadcast %cst_25 : f32 to vector<16x1xf32>
      %32 = arith.mulf %30, %31 : vector<16x1xf32>
      %33 = math.sqrt %32 : vector<16x1xf32>
      %cst_26 = arith.constant 9.99999997E-7 : f32
      %34 = vector.broadcast %cst_26 : f32 to vector<16x1xf32>
      %35 = arith.addf %33, %34 : vector<16x1xf32>
      %36 = vector.broadcast %35 : vector<16x1xf32> to vector<16x32xf32>
      %37 = arith.divf %27, %36 : vector<16x32xf32>
      %38 = vector.broadcast %20 : vector<1x32xf32> to vector<16x32xf32>
      %39 = arith.mulf %38, %37 : vector<16x32xf32>
      %40 = vector.broadcast %21 : vector<1x32xf32> to vector<16x32xf32>
      %41 = arith.addf %39, %40 : vector<16x32xf32>
      %c0_27 = arith.constant 0 : index
      %c0_28 = arith.constant 0 : index
      %42 = vector.load %arg10[%c0_27, %c0_28] : memref<16x32xf32, #tpu.memory_space<vmem>>, vector<16x32xf32>
      tpu.vector_store %arg10[%c0_27, %c0_28], %41 {strides = array<i32>} : memref<16x32xf32, #tpu.memory_space<vmem>>, vector<16x32xf32>,
      %cst_29 = arith.constant 0.000000e+00 : f32
      %43 = vector.broadcast %cst_29 : f32 to vector<16x32xf32>
      %c0_30 = arith.constant 0 : index
      %c0_31 = arith.constant 0 : index
      %44 = vector.load %arg11[%c0_30, %c0_31] : memref<16x32xf32, #tpu.memory_space<vmem>>, vector<16x32xf32>
      tpu.vector_store %arg11[%c0_30, %c0_31], %43 {strides = array<i32>} : memref<16x32xf32, #tpu.memory_space<vmem>>, vector<16x32xf32>,
    } else {
    }
    %c0 = arith.constant 0 : index
    %c0_1 = arith.constant 0 : index
    %3 = vector.load %arg10[%c0, %c0_1] : memref<16x32xf32, #tpu.memory_space<vmem>>, vector<16x32xf32>
    %c0_2 = arith.constant 0 : index
    %c0_3 = arith.constant 0 : index
    %4 = vector.load %arg5[%c0_2, %c0_3] : memref<32x64xf32, #tpu.memory_space<vmem>>, vector<32x64xf32>
    %cst = arith.constant dense<0.000000e+00> : vector<16x64xf32>
    %5 = tpu.matmul %3, %4, %cst {dimension_numbers = #tpu.dot_dimension_numbers<[1], [0], [0], [1], [0, 0, 1, 1], [], []>} : vector<16x32xf32>, vector<32x64xf32>, vector<16x64xf32> -> vector<16x64xf32>
    %c0_4 = arith.constant 0 : index
    %c0_5 = arith.constant 0 : index
    %6 = vector.load %arg6[%c0_4, %c0_5] : memref<1x64xf32, #tpu.memory_space<vmem>>, vector<1x64xf32>
    %7 = vector.broadcast %6 : vector<1x64xf32> to vector<16x64xf32>
    %8 = arith.addf %5, %7 : vector<16x64xf32>
    %cst_6 = arith.constant 0.000000e+00 : f32
    %9 = vector.broadcast %cst_6 : f32 to vector<16x64xf32>
    %10 = arith.maximumf %8, %9 : vector<16x64xf32>
    %c0_7 = arith.constant 0 : index
    %c0_8 = arith.constant 0 : index
    %11 = vector.load %arg11[%c0_7, %c0_8] : memref<16x32xf32, #tpu.memory_space<vmem>>, vector<16x32xf32>
    %c0_9 = arith.constant 0 : index
    %c0_10 = arith.constant 0 : index
    %12 = vector.load %arg7[%c0_9, %c0_10] : memref<64x32xf32, #tpu.memory_space<vmem>>, vector<64x32xf32>
    %cst_11 = arith.constant dense<0.000000e+00> : vector<16x32xf32>
    %13 = tpu.matmul %10, %12, %cst_11 {dimension_numbers = #tpu.dot_dimension_numbers<[1], [0], [0], [1], [0, 0, 1, 1], [], []>} : vector<16x64xf32>, vector<64x32xf32>, vector<16x32xf32> -> vector<16x32xf32>
    %14 = arith.addf %11, %13 : vector<16x32xf32>
    %c0_12 = arith.constant 0 : index
    %c0_13 = arith.constant 0 : index
    %15 = vector.load %arg11[%c0_12, %c0_13] : memref<16x32xf32, #tpu.memory_space<vmem>>, vector<16x32xf32>
    tpu.vector_store %arg11[%c0_12, %c0_13], %14 {strides = array<i32>} : memref<16x32xf32, #tpu.memory_space<vmem>>, vector<16x32xf32>,
    %c0_i32_14 = arith.constant 0 : i32
    %16 = arith.cmpi eq, %arg1, %c0_i32_14 : i32
    %17 = arith.extui %16 : i1 to i32
    %c0_i32_15 = arith.constant 0 : i32
    %18 = arith.cmpi ne, %17, %c0_i32_15 : i32
    scf.if %18 {
      %c0_16 = arith.constant 0 : index
      %c0_17 = arith.constant 0 : index
      %19 = vector.load %arg11[%c0_16, %c0_17] : memref<16x32xf32, #tpu.memory_space<vmem>>, vector<16x32xf32>
      %c0_18 = arith.constant 0 : index
      %c0_19 = arith.constant 0 : index
      %20 = vector.load %arg8[%c0_18, %c0_19] : memref<1x32xf32, #tpu.memory_space<vmem>>, vector<1x32xf32>
      %21 = vector.broadcast %20 : vector<1x32xf32> to vector<16x32xf32>
      %22 = arith.addf %19, %21 : vector<16x32xf32>
      %c0_20 = arith.constant 0 : index
      %c0_21 = arith.constant 0 : index
      %23 = vector.load %arg2[%c0_20, %c0_21] : memref<16x32xf32, #tpu.memory_space<vmem>>, vector<16x32xf32>
      %24 = arith.addf %22, %23 : vector<16x32xf32>
      %c0_22 = arith.constant 0 : index
      %c0_23 = arith.constant 0 : index
      %25 = vector.load %arg9[%c0_22, %c0_23] : memref<16x32xf32, #tpu.memory_space<vmem>>, vector<16x32xf32>
      tpu.vector_store %arg9[%c0_22, %c0_23], %24 {strides = array<i32>} : memref<16x32xf32, #tpu.memory_space<vmem>>, vector<16x32xf32>,
    } else {
    }
    return
  }
  func.func @transform_0(%arg0: i32, %arg1: i32) -> (i32, i32) {
    %c0_i32 = arith.constant 0 : i32
    %c0_i32_0 = arith.constant 0 : i32
    return %arg0, %c0_i32 : i32, i32
  }
  func.func @transform_1(%arg0: i32, %arg1: i32) -> (i32, i32) {
    %c0_i32 = arith.constant 0 : i32
    %c0_i32_0 = arith.constant 0 : i32
    %c0_i32_1 = arith.constant 0 : i32
    return %c0_i32, %c0_i32_0 : i32, i32
  }
  func.func @transform_2(%arg0: i32, %arg1: i32) -> (i32, i32) {
    %c0_i32 = arith.constant 0 : i32
    %c0_i32_0 = arith.constant 0 : i32
    %c0_i32_1 = arith.constant 0 : i32
    return %c0_i32, %c0_i32_0 : i32, i32
  }
  func.func @transform_3(%arg0: i32, %arg1: i32) -> (i32, i32) {
    %c0_i32 = arith.constant 0 : i32
    %c0_i32_0 = arith.constant 0 : i32
    return %c0_i32, %arg1 : i32, i32
  }
  func.func @transform_4(%arg0: i32, %arg1: i32) -> (i32, i32) {
    %c0_i32 = arith.constant 0 : i32
    %c0_i32_0 = arith.constant 0 : i32
    return %c0_i32, %arg1 : i32, i32
  }
  func.func @transform_5(%arg0: i32, %arg1: i32) -> (i32, i32) {
    %c0_i32 = arith.constant 0 : i32
    %c0_i32_0 = arith.constant 0 : i32
    return %arg1, %c0_i32 : i32, i32
  }
  func.func @transform_6(%arg0: i32, %arg1: i32) -> (i32, i32) {
    %c0_i32 = arith.constant 0 : i32
    %c0_i32_0 = arith.constant 0 : i32
    %c0_i32_1 = arith.constant 0 : i32
    return %c0_i32, %c0_i32_0 : i32, i32
  }
  func.func @transform_7(%arg0: i32, %arg1: i32) -> (i32, i32) {
    %c0_i32 = arith.constant 0 : i32
    %c0_i32_0 = arith.constant 0 : i32
    return %arg0, %c0_i32 : i32, i32
  }
}

</mosaic_0001>

<llo_original>
// kernel: encoder_block_forward.3
$region0: #{encoder_block_forward.3}
  #allocation0 [shape = 'u32[]', space=smem, size = 0x4, offset = 0x4, fixed_abs, tag = 'smem constant byte address 0x4 - core index']
  #allocation1 [shape = 'u32[72,128]{1,0:T(1,128)}', space=vmem, size = 0x9000, scoped, tag = 'internal scratch']
  #allocation2 [shape = 'f32[16,32]{1,0:T(8,128)}', space=vmem, size = 0x2000, scoped, tag = 'scratch operand']
  %s0 = inlined_call_operand.vmem [shape: f32[16,32], index: 0, kind: input, shape index: {}]
  %s1 = inlined_call_operand.vmem [shape: f32[1,32], index: 1, kind: input, shape index: {}]
  %s2 = inlined_call_operand.vmem [shape: f32[1,32], index: 2, kind: input, shape index: {}]
  %s3 = inlined_call_operand.vmem [shape: f32[32,96], index: 3, kind: input, shape index: {}]
  %s4 = inlined_call_operand.vmem [shape: f32[16,96], index: 4, kind: output, shape index: {}]
  %s5 = sld [smem:[#allocation0]]
  $region30: #{encoder_block_forward.3} parent=0
    _
  %s7 = ssub.s32 1, %s5
  %s8 = scalar_select 0, %s7, %s5
  // Predicated region
  $region2: #{encoder_block_forward.3} parent=0 // pred_check
    _
  $region3: #{encoder_block_forward.3} parent=0 // pred_check_branch
    %10 = sbr.rel (0) target = $region5
  $region4: #{encoder_block_forward.3} parent=0 // pred_region
    _
  $region5: #{encoder_block_forward.3} parent=0 // pred_fallthru
    _
  // Predicated region
  $region6: #{encoder_block_forward.3} parent=0 // pred_check
    _
  $region7: #{encoder_block_forward.3} parent=0 // pred_check_branch
    %12 = sbr.rel (0) target = $region9
  $region8: #{encoder_block_forward.3} parent=0 // pred_region
    _
  $region9: #{encoder_block_forward.3} parent=0 // pred_fallthru
    _
  // Predicated region
  $region10: #{encoder_block_forward.3} parent=0 // pred_check
    _
  $region11: #{encoder_block_forward.3} parent=0 // pred_check_branch
    %14 = sbr.rel (0) target = $region13
  $region12: #{encoder_block_forward.3} parent=0 // pred_region
    _
  $region13: #{encoder_block_forward.3} parent=0 // pred_fallthru
    _
  // Predicated region
  $region14: #{encoder_block_forward.3} parent=0 // pred_check
    _
  $region15: #{encoder_block_forward.3} parent=0 // pred_check_branch
    %16 = sbr.rel (0) target = $region17
  $region16: #{encoder_block_forward.3} parent=0 // pred_region
    _
  $region17: #{encoder_block_forward.3} parent=0 // pred_fallthru
    _
  %p17 = scmp.eq.s32.totalorder 0, 0
  // Predicated region
  $region18: #{encoder_block_forward.3} parent=0 // pred_check
    %p18 = pneg %p17
  $region19: #{encoder_block_forward.3} parent=0 // pred_check_branch
    %20 = sbr.rel (%p18) target = $region21
  $region20: #{encoder_block_forward.3} parent=0 // pred_region
    %v21 = vld [vmem:[%s0] sm:$0xff]
    %v22 = vld [vmem:[%s0 + $0x8] sm:$0xff]
    %v23 = vld [vmem:[%s1] sm:$0x1]
    %v24 = vld [vmem:[%s2] sm:$0x1]
    %vm25 = vcmask 261120
    %v26 = vsel %vm25, %v21, 0.0
    %27 = vadd.xlane.f32.xlu0 %v26
    %v28 = vpop.xlane.xlu0 %27
    %v29 = vsel %vm25, %v22, 0.0
    %30 = vadd.xlane.f32.xlu0 %v29
    %v31 = vpop.xlane.xlu0 %30
    %v32 = vmul.f32 %v28, 0.03125
    %v33 = vmul.f32 %v31, 0.03125
    %v34 = vsub.f32 %v21, %v32
    %v35 = vsub.f32 %v22, %v33
    %v36 = vmul.f32 %v34, %v34
    %v37 = vmul.f32 %v35, %v35
    %v38 = vsel %vm25, %v36, 0.0
    %39 = vadd.xlane.f32.xlu0 %v38
    %v40 = vpop.xlane.xlu0 %39
    %v41 = vsel %vm25, %v37, 0.0
    %42 = vadd.xlane.f32.xlu0 %v41
    %v43 = vpop.xlane.xlu0 %42
    %v44 = vmul.f32 %v40, 0.032258064
    %v45 = vmul.f32 %v43, 0.032258064
    %v46 = vrsqrt.pop %v44
    %v47 = vmul.f32 %v46, %v44
    %v48 = vmul.f32 %v47, %v46
    %v49 = vmul.f32 0.5, %v48
    %v50 = vsub.f32 1.5, %v49
    %v51 = vmul.f32 %v46, %v50
    %v52 = vmul.f32 %v44, %v51
    %vm53 = vcmp.eq.f32.partialorder %v44, inf
    %v54 = vsel %vm53, %v44, %v52
    %vm55 = vcmp.eq.f32.partialorder %v44, 0.0
    %v56 = vand.u32 %v44, 2147483648
    %v57 = vsel %vm55, %v56, %v54
    %v58 = vrsqrt.pop %v45
    %v59 = vmul.f32 %v58, %v45
    %v60 = vmul.f32 %v59, %v58
    %v61 = vmul.f32 0.5, %v60
    %v62 = vsub.f32 1.5, %v61
    %v63 = vmul.f32 %v58, %v62
    %v64 = vmul.f32 %v45, %v63
    %vm65 = vcmp.eq.f32.partialorder %v45, inf
    %v66 = vsel %vm65, %v45, %v64
    %vm67 = vcmp.eq.f32.partialorder %v45, 0.0
    %v68 = vand.u32 %v45, 2147483648
    %v69 = vsel %vm67, %v68, %v66
    %v70 = vadd.f32 %v57, 1e-06
    %v71 = vadd.f32 %v69, 1e-06
    %v72 = vrcp.pop %v70
    %v73 = vmul.f32 %v70, %v72
    %v74 = vsub.f32 1.0, %v73
    %v75 = vmul.f32 %v72, %v74
    %v76 = vadd.f32 %v72, %v75
    %vm77 = vweird.f32 %v70
    %vm78 = vweird.f32 %v72
    %vm79 = vmor %vm77, %vm78
    %v80 = vsel %vm79, %v72, %v76
    %v81 = vand.u32 2147483647, %v70
    %vm82 = vcmp.eq.f32.partialorder %v81, 8.507059e+37
    %v83 = vand.u32 %v70, 2147483648
    %v84 = vor.u32 1.1754944e-38, %v83
    %v85 = vsel %vm82, %v84, %v80
    %v86 = vmul.f32 %v34, %v85
    %v87 = vrcp.pop %v71
    %v88 = vmul.f32 %v71, %v87
    %v89 = vsub.f32 1.0, %v88
    %v90 = vmul.f32 %v87, %v89
    %v91 = vadd.f32 %v87, %v90
    %vm92 = vweird.f32 %v71
    %vm93 = vweird.f32 %v87
    %vm94 = vmor %vm92, %vm93
    %v95 = vsel %vm94, %v87, %v91
    %v96 = vand.u32 2147483647, %v71
    %vm97 = vcmp.eq.f32.partialorder %v96, 8.507059e+37
    %v98 = vand.u32 %v71, 2147483648
    %v99 = vor.u32 1.1754944e-38, %v98
    %v100 = vsel %vm97, %v99, %v95
    %v101 = vmul.f32 %v35, %v100
    %v103 = vperm.slane %v23, 0
    %v105 = vmul.f32 %v103, %v86
    %v106 = vmul.f32 %v103, %v101
    %v108 = vperm.slane %v24, 0
    %v110 = vadd.f32 %v105, %v108
    %v111 = vadd.f32 %v106, %v108
    %112 = vst.msk [vmem:[#allocation2] sm:$0xff] %vm25, %v110
    %113 = vst.msk [vmem:[#allocation2 + $0x8] sm:$0xff] %vm25, %v111
  $region21: #{encoder_block_forward.3} parent=0 // pred_fallthru
    _
  %v114 = vld [vmem:[#allocation2] sm:$0xff]
  %v115 = vld [vmem:[#allocation2 + $0x8] sm:$0xff]
  %v116 = vld [vmem:[%s3] sm:$0xff]
  %v117 = vld [vmem:[%s3 + $0x8] sm:$0xff]
  %v118 = vld [vmem:[%s3 + $0x10] sm:$0xff]
  %v119 = vld [vmem:[%s3 + $0x18] sm:$0xff]
  %vm120 = vcmask 261120
  %v122 = vsel %vm120, %v114, 0
  %v125 = vsel %vm120, %v115, 0
  %127 = vmatpush.msra.mxu0 0.0
  %128 = vmatpush.msra.mxu0 0.0
  %129 = vmatpush.msra.mxu0 0.0
  %130 = vmatpush.msra.mxu0 0.0
  %131 = vmatpush.msra.mxu0 0.0
  %132 = vmatpush.msra.mxu0 0.0
  %133 = vmatpush.msra.mxu0 0.0
  %134 = vmatpush.msra.mxu0 0.0
  %135 = vmatpush.msra.mxu0 0.0
  %136 = vmatpush.msra.mxu0 0.0
  %137 = vmatpush.msra.mxu0 0.0
  %138 = vmatpush.msra.mxu0 0.0
  %139 = vmatpush.msra.mxu0 %v119
  %140 = vmatpush.msra.mxu0 %v118
  %141 = vmatpush.msra.mxu0 %v117
  %142 = vmatpush.msra.mxu0 %v116
  %143 = vmatmul.f32.gmra.mxu0 %v122
  %v144 = vpop.f32.mrf.mxu0
  %v145 = vadd.f32 0.0, %v144
  %146 = vmatmul.f32.gmra.mxu0 %v125
  %v147 = vpop.f32.mrf.mxu0
  %v148 = vadd.f32 0.0, %v147
  %149 = vdwg.mxu0
  %vm150 = vcmask 785408
  %151 = vst.msk [vmem:[%s4] sm:$0xff] %vm150, %v145
  %152 = vst.msk [vmem:[%s4 + $0x8] sm:$0xff] %vm150, %v148
  // Predicated region
  $region22: #{encoder_block_forward.3} parent=0 // pred_check
    _
  $region23: #{encoder_block_forward.3} parent=0 // pred_check_branch
    %154 = sbr.rel (0) target = $region25
  $region24: #{encoder_block_forward.3} parent=0 // pred_region
    _
  $region25: #{encoder_block_forward.3} parent=0 // pred_fallthru
    _
  // Predicated region
  $region26: #{encoder_block_forward.3} parent=0 // pred_check
    _
  $region27: #{encoder_block_forward.3} parent=0 // pred_check_branch
    %156 = sbr.rel (0) target = $region29
  $region28: #{encoder_block_forward.3} parent=0 // pred_region
    _
  $region29: #{encoder_block_forward.3} parent=0 // pred_fallthru
    _

// kernel: encoder_block_forward.4
$region0: #{encoder_block_forward.4}
  #allocation0 [shape = 'u32[]', space=smem, size = 0x4, offset = 0x4, fixed_abs, tag = 'smem constant byte address 0x4 - core index']
  #allocation1 [shape = 'u32[72,128]{1,0:T(1,128)}', space=vmem, size = 0x9000, scoped, tag = 'internal scratch']
  %s0 = inlined_call_operand.vmem [shape: f32[2,8,96], index: 0, kind: input, shape index: {}]
  %s1 = inlined_call_operand.vmem [shape: f32[2,1,8,8], index: 1, kind: input, shape index: {}]
  %s2 = inlined_call_operand.vmem [shape: f32[32,32], index: 2, kind: input, shape index: {}]
  %s3 = inlined_call_operand.vmem [shape: f32[2,8,32], index: 3, kind: input, shape index: {}]
  %s4 = inlined_call_operand.vmem [shape: f32[2,8,32], index: 4, kind: output, shape index: {}]
  %s5 = sld [smem:[#allocation0]]
  $region49: #{encoder_block_forward.4} parent=0
    _
  %s7 = ssub.s32 1, %s5
  %s8 = scalar_select 0, %s7, %s5
  loop: start=0, step=1, limit=4
  $region2: #{encoder_block_forward.4} parent=0 // loop_pre_header
    _
  $region3: #{encoder_block_forward.4} parent=0 // loop_header
    %s10 = sphi 0, %s14
    %p11 = scmp.ge.s32.totalorder %s10, 4
    %s20 = sphi 0, %s22
    %s23 = sphi 0, %s20
    %s24 = sphi 0, %s23
    %s40 = sphi 0, %s24
    %s46 = sphi 0, %s48
    %s49 = sphi 0, %s46
    %s50 = sphi 0, %s49
    %s66 = sphi 0, %s50
    %s70 = sphi 0, %s70
    %s72 = sphi 0, %s70
    %s73 = sphi 0, %s72
    %s87 = sphi 0, %s73
    %s93 = sphi 0, %s95
    %s96 = sphi 0, %s93
    %s97 = sphi 0, %s96
    %s113 = sphi 0, %s97
    %s119 = sphi 0, %s121
    %s122 = sphi 0, %s119
    %s123 = sphi 0, %s122
    %s139 = sphi 0, %s123
  $region4: #{encoder_block_forward.4} parent=0 // loop_header_branch
    %13 = sbr.rel (%p11) target = $region8
  $region5: #{encoder_block_forward.4} parent=0 // loop_body
    %s15 = ssub.s32 %s10, 1
    %s16 = ssub.s32 %s10, 2
    %s17 = sadd.s32 %s10, 1
    %s18 = ssub.s32 %s10, %s17
    %p19 = scmp.eq.s32.totalorder %s18, 0
    %s21 = sadd.s32 %s20, 1
    %s22 = scalar_select %p19, %s20, %s21
    %p25 = pneg %p19
    %p26 = scmp.eq.s32.totalorder %s10, 1
    %p27 = por %p25, %p26
    %p28 = scmp.ne.s32.totalorder %s20, %s23
    %p29 = scmp.eq.s32.totalorder %s10, 0
    %p30 = por %p28, %p29
    %p31 = scmp.ne.s32.totalorder %s20, %s23
    %p32 = scmp.eq.s32.totalorder %s15, 1
    %p33 = por %p31, %p32
    %p34 = scmp.ne.s32.totalorder %s23, %s24
    %p35 = scmp.eq.s32.totalorder %s15, 0
    %p36 = por %p34, %p35
    %p37 = scmp.ne.s32.totalorder %s23, %s24
    %p38 = scmp.eq.s32.totalorder %s16, 1
    %p39 = por %p37, %p38
    %p41 = scmp.ne.s32.totalorder %s24, %s40
    %p42 = scmp.eq.s32.totalorder %s16, 0
    %p43 = por %p41, %p42
    %s44 = ssub.s32 %s10, %s17
    %p45 = scmp.eq.s32.totalorder %s44, 0
    %s47 = sadd.s32 %s46, 1
    %s48 = scalar_select %p45, %s46, %s47
    %p51 = pneg %p45
    %p52 = scmp.eq.s32.totalorder %s10, 1
    %p53 = por %p51, %p52
    %p54 = scmp.ne.s32.totalorder %s46, %s49
    %p55 = scmp.eq.s32.totalorder %s10, 0
    %p56 = por %p54, %p55
    %p57 = scmp.ne.s32.totalorder %s46, %s49
    %p58 = scmp.eq.s32.totalorder %s15, 1
    %p59 = por %p57, %p58
    %p60 = scmp.ne.s32.totalorder %s49, %s50
    %p61 = scmp.eq.s32.totalorder %s15, 0
    %p62 = por %p60, %p61
    %p63 = scmp.ne.s32.totalorder %s49, %s50
    %p64 = scmp.eq.s32.totalorder %s16, 1
    %p65 = por %p63, %p64
    %p67 = scmp.ne.s32.totalorder %s50, %s66
    %p68 = scmp.eq.s32.totalorder %s16, 0
    %p69 = por %p67, %p68
    %s71 = sadd.s32 %s70, 1
    %p74 = scmp.eq.s32.totalorder %s10, 1
    %p75 = scmp.ne.s32.totalorder %s70, %s72
    %p76 = scmp.eq.s32.totalorder %s10, 0
    %p77 = por %p75, %p76
    %p78 = scmp.ne.s32.totalorder %s70, %s72
    %p79 = scmp.eq.s32.totalorder %s15, 1
    %p80 = por %p78, %p79
    %p81 = scmp.ne.s32.totalorder %s72, %s73
    %p82 = scmp.eq.s32.totalorder %s15, 0
    %p83 = por %p81, %p82
    %p84 = scmp.ne.s32.totalorder %s72, %s73
    %p85 = scmp.eq.s32.totalorder %s16, 1
    %p86 = por %p84, %p85
    %p88 = scmp.ne.s32.totalorder %s73, %s87
    %p89 = scmp.eq.s32.totalorder %s16, 0
    %p90 = por %p88, %p89
    %s91 = ssub.s32 %s10, %s17
    %p92 = scmp.eq.s32.totalorder %s91, 0
    %s94 = sadd.s32 %s93, 1
    %s95 = scalar_select %p92, %s93, %s94
    %p98 = pneg %p92
    %p99 = scmp.eq.s32.totalorder %s10, 1
    %p100 = por %p98, %p99
    %p101 = scmp.ne.s32.totalorder %s93, %s96
    %p102 = scmp.eq.s32.totalorder %s10, 0
    %p103 = por %p101, %p102
    %p104 = scmp.ne.s32.totalorder %s93, %s96
    %p105 = scmp.eq.s32.totalorder %s15, 1
    %p106 = por %p104, %p105
    %p107 = scmp.ne.s32.totalorder %s96, %s97
    %p108 = scmp.eq.s32.totalorder %s15, 0
    %p109 = por %p107, %p108
    %p110 = scmp.ne.s32.totalorder %s96, %s97
    %p111 = scmp.eq.s32.totalorder %s16, 1
    %p112 = por %p110, %p111
    %p114 = scmp.ne.s32.totalorder %s97, %s113
    %p115 = scmp.eq.s32.totalorder %s16, 0
    %p116 = por %p114, %p115
    %s117 = ssub.s32 %s10, %s17
    %p118 = scmp.eq.s32.totalorder %s117, 0
    %s120 = sadd.s32 %s119, 1
    %s121 = scalar_select %p118, %s119, %s120
    %p124 = pneg %p118
    %p125 = scmp.eq.s32.totalorder %s10, 1
    %p126 = por %p124, %p125
    %p127 = scmp.ne.s32.totalorder %s119, %s122
    %p128 = scmp.eq.s32.totalorder %s10, 0
    %p129 = por %p127, %p128
    %p130 = scmp.ne.s32.totalorder %s119, %s122
    %p131 = scmp.eq.s32.totalorder %s15, 1
    %p132 = por %p130, %p131
    %p133 = scmp.ne.s32.totalorder %s122, %s123
    %p134 = scmp.eq.s32.totalorder %s15, 0
    %p135 = por %p133, %p134
    %p136 = scmp.ne.s32.totalorder %s122, %s123
    %p137 = scmp.eq.s32.totalorder %s16, 1
    %p138 = por %p136, %p137
    %p140 = scmp.ne.s32.totalorder %s123, %s139
    %p141 = scmp.eq.s32.totalorder %s16, 0
    %p142 = por %p140, %p141
    %p143 = scmp.le.s32.totalorder 1, %s10
    %p144 = scmp.lt.s32.totalorder %s10, 3
    %p145 = pnand %p143, %p144
    %p146 = pneg %p145
    // Predicated region
    $region9: #{encoder_block_forward.4} parent=5 // pred_check
      _
    $region10: #{encoder_block_forward.4} parent=5 // pred_check_branch
      %148 = sbr.rel (%p145) target = $region12
    $region11: #{encoder_block_forward.4} parent=5 // pred_region
      %s149 = ssub.s32 %s10, 1
      // Predicated region
      $region13: #{encoder_block_forward.4} parent=11 // pred_check
        %p150 = pneg %p83
      $region14: #{encoder_block_forward.4} parent=11 // pred_check_branch
        %152 = sbr.rel (%p150) target = $region16
      $region15: #{encoder_block_forward.4} parent=11 // pred_region
        _
      $region16: #{encoder_block_forward.4} parent=11 // pred_fallthru
        _
    $region12: #{encoder_block_forward.4} parent=5 // pred_fallthru
      _
    %p153 = scmp.lt.s32.totalorder %s10, 2
    // Predicated region
    $region17: #{encoder_block_forward.4} parent=5 // pred_check
      %p154 = pneg %p153
    $region18: #{encoder_block_forward.4} parent=5 // pred_check_branch
      %156 = sbr.rel (%p154) target = $region20
    $region19: #{encoder_block_forward.4} parent=5 // pred_region
      // Predicated region
      $region21: #{encoder_block_forward.4} parent=19 // pred_check
        %p157 = pneg %p30
      $region22: #{encoder_block_forward.4} parent=19 // pred_check_branch
        %159 = sbr.rel (%p157) target = $region24
      $region23: #{encoder_block_forward.4} parent=19 // pred_region
        %p160 = scmp.lt.s32.totalorder %s10, 1
        %s161 = scalar_select %p160, %s10, 1
        %s162 = smul.addr %s161, 8
        %s163 = scalar_lea.vmem %s0, %s162
      $region24: #{encoder_block_forward.4} parent=19 // pred_fallthru
        _
      // Predicated region
      $region25: #{encoder_block_forward.4} parent=19 // pred_check
        %p164 = pneg %p56
      $region26: #{encoder_block_forward.4} parent=19 // pred_check_branch
        %166 = sbr.rel (%p164) target = $region28
      $region27: #{encoder_block_forward.4} parent=19 // pred_region
        %p167 = scmp.lt.s32.totalorder %s10, 1
        %s168 = scalar_select %p167, %s10, 1
        %s169 = smul.addr %s168, 8
        %s170 = scalar_lea.vmem %s1, %s169
      $region28: #{encoder_block_forward.4} parent=19 // pred_fallthru
        _
      // Predicated region
      $region29: #{encoder_block_forward.4} parent=19 // pred_check
        %p171 = pneg %p103
      $region30: #{encoder_block_forward.4} parent=19 // pred_check_branch
        %173 = sbr.rel (%p171) target = $region32
      $region31: #{encoder_block_forward.4} parent=19 // pred_region
        %p174 = scmp.lt.s32.totalorder %s10, 1
        %s175 = scalar_select %p174, %s10, 1
        %s176 = smul.addr %s175, 8
        %s177 = scalar_lea.vmem %s3, %s176
      $region32: #{encoder_block_forward.4} parent=19 // pred_fallthru
        _
    $region20: #{encoder_block_forward.4} parent=5 // pred_fallthru
      _
    %p178 = scmp.le.s32.totalorder 1, %s10
    %p179 = scmp.lt.s32.totalorder %s10, 3
    %p180 = pnand %p178, %p179
    %p181 = pneg %p180
    // Predicated region
    $region33: #{encoder_block_forward.4} parent=5 // pred_check
      _
    $region34: #{encoder_block_forward.4} parent=5 // pred_check_branch
      %183 = sbr.rel (%p180) target = $region36
    $region35: #{encoder_block_forward.4} parent=5 // pred_region
      %s184 = ssub.s32 %s10, 1
      %p185 = scmp.lt.s32.totalorder %s15, 1
      %s186 = scalar_select %p185, %s15, 1
      %s187 = smul.addr %s186, 8
      %s188 = scalar_lea.vmem %s0, %s187
      %p189 = pneg %p36
      %p190 = pneg %p33
      %p191 = scmp.lt.s32.totalorder %s15, 1
      %s192 = scalar_select %p191, %s15, 1
      %s193 = smul.addr %s192, 8
      %s194 = scalar_lea.vmem %s1, %s193
      %p195 = pneg %p62
      %p196 = pneg %p59
      %p197 = pneg %p83
      %p198 = pneg %p80
      %p199 = scmp.lt.s32.totalorder %s15, 1
      %s200 = scalar_select %p199, %s15, 1
      %s201 = smul.addr %s200, 8
      %s202 = scalar_lea.vmem %s3, %s201
      %p203 = pneg %p109
      %p204 = pneg %p106
      %p205 = pneg %p135
      %p206 = pneg %p132
      %p207 = scmp.lt.s32.totalorder %s15, 1
      %s208 = scalar_select %p207, %s15, 1
      %s209 = smul.addr %s208, 8
      %s210 = scalar_lea.vmem %s4, %s209
      %p211 = scmp.lt.s32.totalorder %s15, 1
      %s212 = scalar_select %p211, %s15, 1
      %s213 = smul.addr %s212, 8
      %s214 = scalar_lea.vmem %s0, %s213
      %p215 = scmp.lt.s32.totalorder %s15, 1
      %s216 = scalar_select %p215, %s15, 1
      %s217 = smul.addr %s216, 8
      %s218 = scalar_lea.vmem %s1, %s217
      %p219 = scmp.lt.s32.totalorder %s15, 1
      %s220 = scalar_select %p219, %s15, 1
      %s221 = smul.addr %s220, 8
      %s222 = scalar_lea.vmem %s3, %s221
      %p223 = scmp.lt.s32.totalorder %s15, 1
      %s224 = scalar_select %p223, %s15, 1
      %s225 = smul.addr %s224, 8
      %s226 = scalar_lea.vmem %s4, %s225
      %v227 = vld [vmem:[%s214] sm:$0xff]
      %v228 = vld [vmem:[%s218] sm:$0xff]
      %v229 = vld [vmem:[%s222] sm:$0xff]
      %231 = vrot.lane.b32.xlu0 %v227, 96
      %v232 = vpop.permute.xlu0 %231
      %vm233 = vcmask 64512
      %v234 = vsel %vm233, %v227, 0
      %v236 = vsel %vm233, %v232, 0
      %238 = vmatpush.xpose.msra.mxu0 0.0
      %239 = vmatpush.xpose.msra.mxu0 0.0
      %240 = vmatpush.xpose.msra.mxu0 0.0
      %241 = vmatpush.xpose.msra.mxu0 0.0
      %242 = vmatpush.xpose.msra.mxu0 0.0
      %243 = vmatpush.xpose.msra.mxu0 0.0
      %244 = vmatpush.xpose.msra.mxu0 0.0
      %245 = vmatpush.xpose.msra.mxu0 0.0
      %246 = vmatpush.xpose.msra.mxu0 0.0
      %247 = vmatpush.xpose.msra.mxu0 0.0
      %248 = vmatpush.xpose.msra.mxu0 0.0
      %249 = vmatpush.xpose.msra.mxu0 0.0
      %250 = vmatpush.xpose.msra.mxu0 0.0
      %251 = vmatpush.xpose.msra.mxu0 0.0
      %252 = vmatpush.xpose.msra.mxu0 0.0
      %253 = vmatpush.xpose.msra.mxu0 %v236
      %254 = vmatmul.f32.gmra.mxu0 %v234
      %v255 = vpop.f32.mrf.mxu0
      %v256 = vadd.f32 0.0, %v255
      %257 = vdwg.mxu0
      %v258 = vmul.f32 %v256, 0.35355338
      %vm259 = vcmp.eq.f32.partialorder %v228, 0.0
      %v260 = vsel %vm259, -1e+09, %v258
      %v261 = vsel %vm233, %v260, -inf
      %262 = vmax.xlane.f32.xlu0 %v261
      %v263 = vpop.xlane.xlu0 %262
      %v264 = vsub.f32 %v260, %v263
      %v265 = vmul.f32 %v264, 1.442695
      %v266 = vpow.pop %v265
      %v267 = vsel %vm233, %v266, 0.0
      %268 = vadd.xlane.f32.xlu0 %v267
      %v269 = vpop.xlane.xlu0 %268
      %v270 = vrcp.pop %v269
      %v271 = vmul.f32 %v269, %v270
      %v272 = vsub.f32 1.0, %v271
      %v273 = vmul.f32 %v270, %v272
      %v274 = vadd.f32 %v270, %v273
      %vm275 = vweird.f32 %v269
      %vm276 = vweird.f32 %v270
      %vm277 = vmor %vm275, %vm276
      %v278 = vsel %vm277, %v270, %v274
      %v279 = vand.u32 2147483647, %v269
      %vm280 = vcmp.eq.f32.partialorder %v279, 8.507059e+37
      %v281 = vand.u32 %v269, 2147483648
      %v282 = vor.u32 1.1754944e-38, %v281
      %v283 = vsel %vm280, %v282, %v278
      %v284 = vmul.f32 %v266, %v283
      %285 = vrot.lane.b32.xlu0 %v227, 64
      %v286 = vpop.permute.xlu0 %285
      %v289 = vsel %vm233, %v284, 0
      %291 = vmatpush.msra.mxu0 0.0
      %292 = vmatpush.msra.mxu0 0.0
      %293 = vmatpush.msra.mxu0 0.0
      %294 = vmatpush.msra.mxu0 0.0
      %295 = vmatpush.msra.mxu0 0.0
      %296 = vmatpush.msra.mxu0 0.0
      %297 = vmatpush.msra.mxu0 0.0
      %298 = vmatpush.msra.mxu0 0.0
      %299 = vmatpush.msra.mxu0 0.0
      %300 = vmatpush.msra.mxu0 0.0
      %301 = vmatpush.msra.mxu0 0.0
      %302 = vmatpush.msra.mxu0 0.0
      %303 = vmatpush.msra.mxu0 0.0
      %304 = vmatpush.msra.mxu0 0.0
      %305 = vmatpush.msra.mxu0 0.0
      %306 = vmatpush.msra.mxu0 %v286
      %307 = vmatmul.f32.gmra.mxu0 %v289
      %v308 = vpop.f32.mrf.mxu0
      %v309 = vadd.f32 0.0, %v308
      %310 = vdwg.mxu0
      %v311 = vld [vmem:[%s2] sm:$0xff]
      %v313 = vsel %vm233, %v309, 0
      %315 = vmatpush.msra.mxu0 0.0
      %316 = vmatpush.msra.mxu0 0.0
      %317 = vmatpush.msra.mxu0 0.0
      %318 = vmatpush.msra.mxu0 0.0
      %319 = vmatpush.msra.mxu0 0.0
      %320 = vmatpush.msra.mxu0 0.0
      %321 = vmatpush.msra.mxu0 0.0
      %322 = vmatpush.msra.mxu0 0.0
      %323 = vmatpush.msra.mxu0 0.0
      %324 = vmatpush.msra.mxu0 0.0
      %325 = vmatpush.msra.mxu0 0.0
      %326 = vmatpush.msra.mxu0 0.0
      %327 = vmatpush.msra.mxu0 0.0
      %328 = vmatpush.msra.mxu0 0.0
      %329 = vmatpush.msra.mxu0 0.0
      %330 = vmatpush.msra.mxu0 %v311
      %331 = vmatmul.f32.gmra.mxu0 %v313
      %v332 = vpop.f32.mrf.mxu0
      %v333 = vadd.f32 0.0, %v332
      %334 = vdwg.mxu0
      %v335 = vadd.f32 %v229, %v333
      %336 = vrot.lane.b32.xlu0 %v227, 120
      %v337 = vpop.permute.xlu0 %336
      %338 = vrot.lane.b32.xlu0 %v227, 88
      %v339 = vpop.permute.xlu0 %338
      %v340 = vsel %vm233, %v337, 0
      %v342 = vsel %vm233, %v339, 0
      %344 = vmatpush.xpose.msra.mxu0 0.0
      %345 = vmatpush.xpose.msra.mxu0 0.0
      %346 = vmatpush.xpose.msra.mxu0 0.0
      %347 = vmatpush.xpose.msra.mxu0 0.0
      %348 = vmatpush.xpose.msra.mxu0 0.0
      %349 = vmatpush.xpose.msra.mxu0 0.0
      %350 = vmatpush.xpose.msra.mxu0 0.0
      %351 = vmatpush.xpose.msra.mxu0 0.0
      %352 = vmatpush.xpose.msra.mxu0 0.0
      %353 = vmatpush.xpose.msra.mxu0 0.0
      %354 = vmatpush.xpose.msra.mxu0 0.0
      %355 = vmatpush.xpose.msra.mxu0 0.0
      %356 = vmatpush.xpose.msra.mxu0 0.0
      %357 = vmatpush.xpose.msra.mxu0 0.0
      %358 = vmatpush.xpose.msra.mxu0 0.0
      %359 = vmatpush.xpose.msra.mxu0 %v342
      %360 = vmatmul.f32.gmra.mxu0 %v340
      %v361 = vpop.f32.mrf.mxu0
      %v362 = vadd.f32 0.0, %v361
      %363 = vdwg.mxu0
      %v364 = vmul.f32 %v362, 0.35355338
      %v365 = vsel %vm259, -1e+09, %v364
      %v366 = vsel %vm233, %v365, -inf
      %367 = vmax.xlane.f32.xlu0 %v366
      %v368 = vpop.xlane.xlu0 %367
      %v369 = vsub.f32 %v365, %v368
      %v370 = vmul.f32 %v369, 1.442695
      %v371 = vpow.pop %v370
      %v372 = vsel %vm233, %v371, 0.0
      %373 = vadd.xlane.f32.xlu0 %v372
      %v374 = vpop.xlane.xlu0 %373
      %v375 = vrcp.pop %v374
      %v376 = vmul.f32 %v374, %v375
      %v377 = vsub.f32 1.0, %v376
      %v378 = vmul.f32 %v375, %v377
      %v379 = vadd.f32 %v375, %v378
      %vm380 = vweird.f32 %v374
      %vm381 = vweird.f32 %v375
      %vm382 = vmor %vm380, %vm381
      %v383 = vsel %vm382, %v375, %v379
      %v384 = vand.u32 2147483647, %v374
      %vm385 = vcmp.eq.f32.partialorder %v384, 8.507059e+37
      %v386 = vand.u32 %v374, 2147483648
      %v387 = vor.u32 1.1754944e-38, %v386
      %v388 = vsel %vm385, %v387, %v383
      %v389 = vmul.f32 %v371, %v388
      %390 = vrot.lane.b32.xlu0 %v227, 56
      %v391 = vpop.permute.xlu0 %390
      %v394 = vsel %vm233, %v389, 0
      %396 = vmatpush.msra.mxu0 0.0
      %397 = vmatpush.msra.mxu0 0.0
      %398 = vmatpush.msra.mxu0 0.0
      %399 = vmatpush.msra.mxu0 0.0
      %400 = vmatpush.msra.mxu0 0.0
      %401 = vmatpush.msra.mxu0 0.0
      %402 = vmatpush.msra.mxu0 0.0
      %403 = vmatpush.msra.mxu0 0.0
      %404 = vmatpush.msra.mxu0 0.0
      %405 = vmatpush.msra.mxu0 0.0
      %406 = vmatpush.msra.mxu0 0.0
      %407 = vmatpush.msra.mxu0 0.0
      %408 = vmatpush.msra.mxu0 0.0
      %409 = vmatpush.msra.mxu0 0.0
      %410 = vmatpush.msra.mxu0 0.0
      %411 = vmatpush.msra.mxu0 %v391
      %412 = vmatmul.f32.gmra.mxu0 %v394
      %v413 = vpop.f32.mrf.mxu0
      %v414 = vadd.f32 0.0, %v413
      %415 = vdwg.mxu0
      %v416 = vld [vmem:[%s2 + $0x8] sm:$0xff]
      %v418 = vsel %vm233, %v414, 0
      %420 = vmatpush.msra.mxu0 0.0
      %421 = vmatpush.msra.mxu0 0.0
      %422 = vmatpush.msra.mxu0 0.0
      %423 = vmatpush.msra.mxu0 0.0
      %424 = vmatpush.msra.mxu0 0.0
      %425 = vmatpush.msra.mxu0 0.0
      %426 = vmatpush.msra.mxu0 0.0
      %427 = vmatpush.msra.mxu0 0.0
      %428 = vmatpush.msra.mxu0 0.0
      %429 = vmatpush.msra.mxu0 0.0
      %430 = vmatpush.msra.mxu0 0.0
      %431 = vmatpush.msra.mxu0 0.0
      %432 = vmatpush.msra.mxu0 0.0
      %433 = vmatpush.msra.mxu0 0.0
      %434 = vmatpush.msra.mxu0 0.0
      %435 = vmatpush.msra.mxu0 %v416
      %436 = vmatmul.f32.gmra.mxu0 %v418
      %v437 = vpop.f32.mrf.mxu0
      %v438 = vadd.f32 0.0, %v437
      %439 = vdwg.mxu0
      %v440 = vadd.f32 %v335, %v438
      %441 = vrot.lane.b32.xlu0 %v227, 112
      %v442 = vpop.permute.xlu0 %441
      %443 = vrot.lane.b32.xlu0 %v227, 80
      %v444 = vpop.permute.xlu0 %443
      %v445 = vsel %vm233, %v442, 0
      %v447 = vsel %vm233, %v444, 0
      %449 = vmatpush.xpose.msra.mxu0 0.0
      %450 = vmatpush.xpose.msra.mxu0 0.0
      %451 = vmatpush.xpose.msra.mxu0 0.0
      %452 = vmatpush.xpose.msra.mxu0 0.0
      %453 = vmatpush.xpose.msra.mxu0 0.0
      %454 = vmatpush.xpose.msra.mxu0 0.0
      %455 = vmatpush.xpose.msra.mxu0 0.0
      %456 = vmatpush.xpose.msra.mxu0 0.0
      %457 = vmatpush.xpose.msra.mxu0 0.0
      %458 = vmatpush.xpose.msra.mxu0 0.0
      %459 = vmatpush.xpose.msra.mxu0 0.0
      %460 = vmatpush.xpose.msra.mxu0 0.0
      %461 = vmatpush.xpose.msra.mxu0 0.0
      %462 = vmatpush.xpose.msra.mxu0 0.0
      %463 = vmatpush.xpose.msra.mxu0 0.0
      %464 = vmatpush.xpose.msra.mxu0 %v447
      %465 = vmatmul.f32.gmra.mxu0 %v445
      %v466 = vpop.f32.mrf.mxu0
      %v467 = vadd.f32 0.0, %v466
      %468 = vdwg.mxu0
      %v469 = vmul.f32 %v467, 0.35355338
      %v470 = vsel %vm259, -1e+09, %v469
      %v471 = vsel %vm233, %v470, -inf
      %472 = vmax.xlane.f32.xlu0 %v471
      %v473 = vpop.xlane.xlu0 %472
      %v474 = vsub.f32 %v470, %v473
      %v475 = vmul.f32 %v474, 1.442695
      %v476 = vpow.pop %v475
      %v477 = vsel %vm233, %v476, 0.0
      %478 = vadd.xlane.f32.xlu0 %v477
      %v479 = vpop.xlane.xlu0 %478
      %v480 = vrcp.pop %v479
      %v481 = vmul.f32 %v479, %v480
      %v482 = vsub.f32 1.0, %v481
      %v483 = vmul.f32 %v480, %v482
      %v484 = vadd.f32 %v480, %v483
      %vm485 = vweird.f32 %v479
      %vm486 = vweird.f32 %v480
      %vm487 = vmor %vm485, %vm486
      %v488 = vsel %vm487, %v480, %v484
      %v489 = vand.u32 2147483647, %v479
      %vm490 = vcmp.eq.f32.partialorder %v489, 8.507059e+37
      %v491 = vand.u32 %v479, 2147483648
      %v492 = vor.u32 1.1754944e-38, %v491
      %v493 = vsel %vm490, %v492, %v488
      %v494 = vmul.f32 %v476, %v493
      %495 = vrot.lane.b32.xlu0 %v227, 48
      %v496 = vpop.permute.xlu0 %495
      %v499 = vsel %vm233, %v494, 0
      %501 = vmatpush.msra.mxu0 0.0
      %502 = vmatpush.msra.mxu0 0.0
      %503 = vmatpush.msra.mxu0 0.0
      %504 = vmatpush.msra.mxu0 0.0
      %505 = vmatpush.msra.mxu0 0.0
      %506 = vmatpush.msra.mxu0 0.0
      %507 = vmatpush.msra.mxu0 0.0
      %508 = vmatpush.msra.mxu0 0.0
      %509 = vmatpush.msra.mxu0 0.0
      %510 = vmatpush.msra.mxu0 0.0
      %511 = vmatpush.msra.mxu0 0.0
      %512 = vmatpush.msra.mxu0 0.0
      %513 = vmatpush.msra.mxu0 0.0
      %514 = vmatpush.msra.mxu0 0.0
      %515 = vmatpush.msra.mxu0 0.0
      %516 = vmatpush.msra.mxu0 %v496
      %517 = vmatmul.f32.gmra.mxu0 %v499
      %v518 = vpop.f32.mrf.mxu0
      %v519 = vadd.f32 0.0, %v518
      %520 = vdwg.mxu0
      %v521 = vld [vmem:[%s2 + $0x10] sm:$0xff]
      %v523 = vsel %vm233, %v519, 0
      %525 = vmatpush.msra.mxu0 0.0
      %526 = vmatpush.msra.mxu0 0.0
      %527 = vmatpush.msra.mxu0 0.0
      %528 = vmatpush.msra.mxu0 0.0
      %529 = vmatpush.msra.mxu0 0.0
      %530 = vmatpush.msra.mxu0 0.0
      %531 = vmatpush.msra.mxu0 0.0
      %532 = vmatpush.msra.mxu0 0.0
      %533 = vmatpush.msra.mxu0 0.0
      %534 = vmatpush.msra.mxu0 0.0
      %535 = vmatpush.msra.mxu0 0.0
      %536 = vmatpush.msra.mxu0 0.0
      %537 = vmatpush.msra.mxu0 0.0
      %538 = vmatpush.msra.mxu0 0.0
      %539 = vmatpush.msra.mxu0 0.0
      %540 = vmatpush.msra.mxu0 %v521
      %541 = vmatmul.f32.gmra.mxu0 %v523
      %v542 = vpop.f32.mrf.mxu0
      %v543 = vadd.f32 0.0, %v542
      %544 = vdwg.mxu0
      %v545 = vadd.f32 %v440, %v543
      %546 = vrot.lane.b32.xlu0 %v227, 104
      %v547 = vpop.permute.xlu0 %546
      %548 = vrot.lane.b32.xlu0 %v227, 72
      %v549 = vpop.permute.xlu0 %548
      %v550 = vsel %vm233, %v547, 0
      %v552 = vsel %vm233, %v549, 0
      %554 = vmatpush.xpose.msra.mxu0 0.0
      %555 = vmatpush.xpose.msra.mxu0 0.0
      %556 = vmatpush.xpose.msra.mxu0 0.0
      %557 = vmatpush.xpose.msra.mxu0 0.0
      %558 = vmatpush.xpose.msra.mxu0 0.0
      %559 = vmatpush.xpose.msra.mxu0 0.0
      %560 = vmatpush.xpose.msra.mxu0 0.0
      %561 = vmatpush.xpose.msra.mxu0 0.0
      %562 = vmatpush.xpose.msra.mxu0 0.0
      %563 = vmatpush.xpose.msra.mxu0 0.0
      %564 = vmatpush.xpose.msra.mxu0 0.0
      %565 = vmatpush.xpose.msra.mxu0 0.0
      %566 = vmatpush.xpose.msra.mxu0 0.0
      %567 = vmatpush.xpose.msra.mxu0 0.0
      %568 = vmatpush.xpose.msra.mxu0 0.0
      %569 = vmatpush.xpose.msra.mxu0 %v552
      %570 = vmatmul.f32.gmra.mxu0 %v550
      %v571 = vpop.f32.mrf.mxu0
      %v572 = vadd.f32 0.0, %v571
      %573 = vdwg.mxu0
      %v574 = vmul.f32 %v572, 0.35355338
      %v575 = vsel %vm259, -1e+09, %v574
      %v576 = vsel %vm233, %v575, -inf
      %577 = vmax.xlane.f32.xlu0 %v576
      %v578 = vpop.xlane.xlu0 %577
      %v579 = vsub.f32 %v575, %v578
      %v580 = vmul.f32 %v579, 1.442695
      %v581 = vpow.pop %v580
      %v582 = vsel %vm233, %v581, 0.0
      %583 = vadd.xlane.f32.xlu0 %v582
      %v584 = vpop.xlane.xlu0 %583
      %v585 = vrcp.pop %v584
      %v586 = vmul.f32 %v584, %v585
      %v587 = vsub.f32 1.0, %v586
      %v588 = vmul.f32 %v585, %v587
      %v589 = vadd.f32 %v585, %v588
      %vm590 = vweird.f32 %v584
      %vm591 = vweird.f32 %v585
      %vm592 = vmor %vm590, %vm591
      %v593 = vsel %vm592, %v585, %v589
      %v594 = vand.u32 2147483647, %v584
      %vm595 = vcmp.eq.f32.partialorder %v594, 8.507059e+37
      %v596 = vand.u32 %v584, 2147483648
      %v597 = vor.u32 1.1754944e-38, %v596
      %v598 = vsel %vm595, %v597, %v593
      %v599 = vmul.f32 %v581, %v598
      %600 = vrot.lane.b32.xlu0 %v227, 40
      %v601 = vpop.permute.xlu0 %600
      %v604 = vsel %vm233, %v599, 0
      %606 = vmatpush.msra.mxu0 0.0
      %607 = vmatpush.msra.mxu0 0.0
      %608 = vmatpush.msra.mxu0 0.0
      %609 = vmatpush.msra.mxu0 0.0
      %610 = vmatpush.msra.mxu0 0.0
      %611 = vmatpush.msra.mxu0 0.0
      %612 = vmatpush.msra.mxu0 0.0
      %613 = vmatpush.msra.mxu0 0.0
      %614 = vmatpush.msra.mxu0 0.0
      %615 = vmatpush.msra.mxu0 0.0
      %616 = vmatpush.msra.mxu0 0.0
      %617 = vmatpush.msra.mxu0 0.0
      %618 = vmatpush.msra.mxu0 0.0
      %619 = vmatpush.msra.mxu0 0.0
      %620 = vmatpush.msra.mxu0 0.0
      %621 = vmatpush.msra.mxu0 %v601
      %622 = vmatmul.f32.gmra.mxu0 %v604
      %v623 = vpop.f32.mrf.mxu0
      %v624 = vadd.f32 0.0, %v623
      %625 = vdwg.mxu0
      %v626 = vld [vmem:[%s2 + $0x18] sm:$0xff]
      %v628 = vsel %vm233, %v624, 0
      %630 = vmatpush.msra.mxu0 0.0
      %631 = vmatpush.msra.mxu0 0.0
      %632 = vmatpush.msra.mxu0 0.0
      %633 = vmatpush.msra.mxu0 0.0
      %634 = vmatpush.msra.mxu0 0.0
      %635 = vmatpush.msra.mxu0 0.0
      %636 = vmatpush.msra.mxu0 0.0
      %637 = vmatpush.msra.mxu0 0.0
      %638 = vmatpush.msra.mxu0 0.0
      %639 = vmatpush.msra.mxu0 0.0
      %640 = vmatpush.msra.mxu0 0.0
      %641 = vmatpush.msra.mxu0 0.0
      %642 = vmatpush.msra.mxu0 0.0
      %643 = vmatpush.msra.mxu0 0.0
      %644 = vmatpush.msra.mxu0 0.0
      %645 = vmatpush.msra.mxu0 %v626
      %646 = vmatmul.f32.gmra.mxu0 %v628
      %v647 = vpop.f32.mrf.mxu0
      %v648 = vadd.f32 0.0, %v647
      %649 = vdwg.mxu0
      %v650 = vadd.f32 %v545, %v648
      %vm651 = vcmask 261120
      %652 = vst.msk [vmem:[%s226] sm:$0xff] %vm651, %v650
      %p653 = scmp.lt.s32.totalorder %s15, 1
      %s654 = scalar_select %p653, %s15, 1
      %s655 = smul.addr %s654, 8
      %s656 = scalar_lea.vmem %s4, %s655
      // Predicated region
      $region37: #{encoder_block_forward.4} parent=35 // pred_check
        %p657 = pneg %p132
      $region38: #{encoder_block_forward.4} parent=35 // pred_check_branch
        %659 = sbr.rel (%p657) target = $region40
      $region39: #{encoder_block_forward.4} parent=35 // pred_region
        _
      $region40: #{encoder_block_forward.4} parent=35 // pred_fallthru
        _
    $region36: #{encoder_block_forward.4} parent=5 // pred_fallthru
      _
    %p660 = scmp.le.s32.totalorder 2, %s10
    // Predicated region
    $region41: #{encoder_block_forward.4} parent=5 // pred_check
      %p661 = pneg %p660
    $region42: #{encoder_block_forward.4} parent=5 // pred_check_branch
      %663 = sbr.rel (%p661) target = $region44
    $region43: #{encoder_block_forward.4} parent=5 // pred_region
      %s664 = ssub.s32 %s10, 2
      // Predicated region
      $region45: #{encoder_block_forward.4} parent=43 // pred_check
        %p665 = pneg %p138
      $region46: #{encoder_block_forward.4} parent=43 // pred_check_branch
        %667 = sbr.rel (%p665) target = $region48
      $region47: #{encoder_block_forward.4} parent=43 // pred_region
        %p668 = scmp.lt.s32.totalorder %s16, 1
        %s669 = scalar_select %p668, %s16, 1
        %s670 = smul.addr %s669, 8
        %s671 = scalar_lea.vmem %s4, %s670
      $region48: #{encoder_block_forward.4} parent=43 // pred_fallthru
        _
    $region44: #{encoder_block_forward.4} parent=5 // pred_fallthru
      _
  $region6: #{encoder_block_forward.4} parent=0 // loop_footer
    %s14 = sadd.s32 1, %s10
  $region7: #{encoder_block_forward.4} parent=0 // loop_footer_branch
    %9 = sbr.rel target = $region3
  $region8: #{encoder_block_forward.4} parent=0 // loop_exit
    _

// kernel: encoder_block_forward.5
$region0: #{encoder_block_forward.5}
  #allocation0 [shape = 'u32[]', space=smem, size = 0x4, offset = 0x4, fixed_abs, tag = 'smem constant byte address 0x4 - core index']
  #allocation1 [shape = 'u32[72,128]{1,0:T(1,128)}', space=vmem, size = 0x9000, scoped, tag = 'internal scratch']
  #allocation2 [shape = 'f32[16,32]{1,0:T(8,128)}', space=vmem, size = 0x2000, scoped, tag = 'scratch operand']
  #allocation3 [shape = 'f32[16,32]{1,0:T(8,128)}', space=vmem, size = 0x2000, scoped, tag = 'scratch operand']
  %s0 = inlined_call_operand.vmem [shape: f32[16,32], index: 0, kind: input, shape index: {}]
  %s1 = inlined_call_operand.vmem [shape: f32[1,32], index: 1, kind: input, shape index: {}]
  %s2 = inlined_call_operand.vmem [shape: f32[1,32], index: 2, kind: input, shape index: {}]
  %s3 = inlined_call_operand.vmem [shape: f32[32,64], index: 3, kind: input, shape index: {}]
  %s4 = inlined_call_operand.vmem [shape: f32[1,64], index: 4, kind: input, shape index: {}]
  %s5 = inlined_call_operand.vmem [shape: f32[64,32], index: 5, kind: input, shape index: {}]
  %s6 = inlined_call_operand.vmem [shape: f32[1,32], index: 6, kind: input, shape index: {}]
  %s7 = inlined_call_operand.hbm [shape: f32[16,32], index: 7, kind: output, shape index: {}]
  %s8 = sld [smem:[#allocation0]]
  $region46: #{encoder_block_forward.5} parent=0
    _
  %s10 = ssub.s32 1, %s8
  %s11 = scalar_select 0, %s10, %s8
  $region1: #{encoder_block_forward.5} parent=0
    #allocation4 [shape = 'u8[8192]{0}', space=vmem, size = 0x2000, scoped, tag = 'output window, operand 0, single buffered']
    #allocation5 [shape = 's32[1]{0}', space=sflag, size = 0x4, scoped, tag = 'scoped memory for encoder_block_forward.5']
    %12 = vsyncpa [#allocation5], 0
    // Predicated region
    $region2: #{encoder_block_forward.5} parent=1 // pred_check
      _
    $region3: #{encoder_block_forward.5} parent=1 // pred_check_branch
      %14 = sbr.rel (0) target = $region5
    $region4: #{encoder_block_forward.5} parent=1 // pred_region
      _
    $region5: #{encoder_block_forward.5} parent=1 // pred_fallthru
      _
    // Predicated region
    $region6: #{encoder_block_forward.5} parent=1 // pred_check
      _
    $region7: #{encoder_block_forward.5} parent=1 // pred_check_branch
      %16 = sbr.rel (0) target = $region9
    $region8: #{encoder_block_forward.5} parent=1 // pred_region
      _
    $region9: #{encoder_block_forward.5} parent=1 // pred_fallthru
      _
    // Predicated region
    $region10: #{encoder_block_forward.5} parent=1 // pred_check
      _
    $region11: #{encoder_block_forward.5} parent=1 // pred_check_branch
      %18 = sbr.rel (0) target = $region13
    $region12: #{encoder_block_forward.5} parent=1 // pred_region
      _
    $region13: #{encoder_block_forward.5} parent=1 // pred_fallthru
      _
    // Predicated region
    $region14: #{encoder_block_forward.5} parent=1 // pred_check
      _
    $region15: #{encoder_block_forward.5} parent=1 // pred_check_branch
      %20 = sbr.rel (0) target = $region17
    $region16: #{encoder_block_forward.5} parent=1 // pred_region
      _
    $region17: #{encoder_block_forward.5} parent=1 // pred_fallthru
      _
    // Predicated region
    $region18: #{encoder_block_forward.5} parent=1 // pred_check
      _
    $region19: #{encoder_block_forward.5} parent=1 // pred_check_branch
      %22 = sbr.rel (0) target = $region21
    $region20: #{encoder_block_forward.5} parent=1 // pred_region
      _
    $region21: #{encoder_block_forward.5} parent=1 // pred_fallthru
      _
    // Predicated region
    $region22: #{encoder_block_forward.5} parent=1 // pred_check
      _
    $region23: #{encoder_block_forward.5} parent=1 // pred_check_branch
      %24 = sbr.rel (0) target = $region25
    $region24: #{encoder_block_forward.5} parent=1 // pred_region
      _
    $region25: #{encoder_block_forward.5} parent=1 // pred_fallthru
      _
    // Predicated region
    $region26: #{encoder_block_forward.5} parent=1 // pred_check
      _
    $region27: #{encoder_block_forward.5} parent=1 // pred_check_branch
      %26 = sbr.rel (0) target = $region29
    $region28: #{encoder_block_forward.5} parent=1 // pred_region
      _
    $region29: #{encoder_block_forward.5} parent=1 // pred_fallthru
      _
    %p27 = scmp.eq.s32.totalorder 0, 0
    // Predicated region
    $region30: #{encoder_block_forward.5} parent=1 // pred_check
      %p28 = pneg %p27
    $region31: #{encoder_block_forward.5} parent=1 // pred_check_branch
      %30 = sbr.rel (%p28) target = $region33
    $region32: #{encoder_block_forward.5} parent=1 // pred_region
      %v31 = vld [vmem:[%s0] sm:$0xff]
      %v32 = vld [vmem:[%s0 + $0x8] sm:$0xff]
      %v33 = vld [vmem:[%s1] sm:$0x1]
      %v34 = vld [vmem:[%s2] sm:$0x1]
      %vm35 = vcmask 261120
      %v36 = vsel %vm35, %v31, 0.0
      %37 = vadd.xlane.f32.xlu0 %v36
      %v38 = vpop.xlane.xlu0 %37
      %v39 = vsel %vm35, %v32, 0.0
      %40 = vadd.xlane.f32.xlu0 %v39
      %v41 = vpop.xlane.xlu0 %40
      %v42 = vmul.f32 %v38, 0.03125
      %v43 = vmul.f32 %v41, 0.03125
      %v44 = vsub.f32 %v31, %v42
      %v45 = vsub.f32 %v32, %v43
      %v46 = vmul.f32 %v44, %v44
      %v47 = vmul.f32 %v45, %v45
      %v48 = vsel %vm35, %v46, 0.0
      %49 = vadd.xlane.f32.xlu0 %v48
      %v50 = vpop.xlane.xlu0 %49
      %v51 = vsel %vm35, %v47, 0.0
      %52 = vadd.xlane.f32.xlu0 %v51
      %v53 = vpop.xlane.xlu0 %52
      %v54 = vmul.f32 %v50, 0.032258064
      %v55 = vmul.f32 %v53, 0.032258064
      %v56 = vrsqrt.pop %v54
      %v57 = vmul.f32 %v56, %v54
      %v58 = vmul.f32 %v57, %v56
      %v59 = vmul.f32 0.5, %v58
      %v60 = vsub.f32 1.5, %v59
      %v61 = vmul.f32 %v56, %v60
      %v62 = vmul.f32 %v54, %v61
      %vm63 = vcmp.eq.f32.partialorder %v54, inf
      %v64 = vsel %vm63, %v54, %v62
      %vm65 = vcmp.eq.f32.partialorder %v54, 0.0
      %v66 = vand.u32 %v54, 2147483648
      %v67 = vsel %vm65, %v66, %v64
      %v68 = vrsqrt.pop %v55
      %v69 = vmul.f32 %v68, %v55
      %v70 = vmul.f32 %v69, %v68
      %v71 = vmul.f32 0.5, %v70
      %v72 = vsub.f32 1.5, %v71
      %v73 = vmul.f32 %v68, %v72
      %v74 = vmul.f32 %v55, %v73
      %vm75 = vcmp.eq.f32.partialorder %v55, inf
      %v76 = vsel %vm75, %v55, %v74
      %vm77 = vcmp.eq.f32.partialorder %v55, 0.0
      %v78 = vand.u32 %v55, 2147483648
      %v79 = vsel %vm77, %v78, %v76
      %v80 = vadd.f32 %v67, 1e-06
      %v81 = vadd.f32 %v79, 1e-06
      %v82 = vrcp.pop %v80
      %v83 = vmul.f32 %v80, %v82
      %v84 = vsub.f32 1.0, %v83
      %v85 = vmul.f32 %v82, %v84
      %v86 = vadd.f32 %v82, %v85
      %vm87 = vweird.f32 %v80
      %vm88 = vweird.f32 %v82
      %vm89 = vmor %vm87, %vm88
      %v90 = vsel %vm89, %v82, %v86
      %v91 = vand.u32 2147483647, %v80
      %vm92 = vcmp.eq.f32.partialorder %v91, 8.507059e+37
      %v93 = vand.u32 %v80, 2147483648
      %v94 = vor.u32 1.1754944e-38, %v93
      %v95 = vsel %vm92, %v94, %v90
      %v96 = vmul.f32 %v44, %v95
      %v97 = vrcp.pop %v81
      %v98 = vmul.f32 %v81, %v97
      %v99 = vsub.f32 1.0, %v98
      %v100 = vmul.f32 %v97, %v99
      %v101 = vadd.f32 %v97, %v100
      %vm102 = vweird.f32 %v81
      %vm103 = vweird.f32 %v97
      %vm104 = vmor %vm102, %vm103
      %v105 = vsel %vm104, %v97, %v101
      %v106 = vand.u32 2147483647, %v81
      %vm107 = vcmp.eq.f32.partialorder %v106, 8.507059e+37
      %v108 = vand.u32 %v81, 2147483648
      %v109 = vor.u32 1.1754944e-38, %v108
      %v110 = vsel %vm107, %v109, %v105
      %v111 = vmul.f32 %v45, %v110
      %v113 = vperm.slane %v33, 0
      %v115 = vmul.f32 %v113, %v96
      %v116 = vmul.f32 %v113, %v111
      %v118 = vperm.slane %v34, 0
      %v120 = vadd.f32 %v115, %v118
      %v121 = vadd.f32 %v116, %v118
      %122 = vst.msk [vmem:[#allocation2] sm:$0xff] %vm35, %v120
      %123 = vst.msk [vmem:[#allocation2 + $0x8] sm:$0xff] %vm35, %v121
      %124 = vst.msk [vmem:[#allocation3] sm:$0xff] %vm35, 0.0
      %125 = vst.msk [vmem:[#allocation3 + $0x8] sm:$0xff] %vm35, 0.0
    $region33: #{encoder_block_forward.5} parent=1 // pred_fallthru
      _
    %v126 = vld [vmem:[#allocation2] sm:$0xff]
    %v127 = vld [vmem:[#allocation2 + $0x8] sm:$0xff]
    %v128 = vld [vmem:[%s3] sm:$0xff]
    %v129 = vld [vmem:[%s3 + $0x8] sm:$0xff]
    %v130 = vld [vmem:[%s3 + $0x10] sm:$0xff]
    %v131 = vld [vmem:[%s3 + $0x18] sm:$0xff]
    %v132 = vld [vmem:[%s4] sm:$0x1]
    %v134 = vperm.slane %v132, 0
    %vm136 = vcmask 261120
    %v138 = vsel %vm136, %v126, 0
    %v141 = vsel %vm136, %v127, 0
    %143 = vmatpush.msra.mxu0 0.0
    %144 = vmatpush.msra.mxu0 0.0
    %145 = vmatpush.msra.mxu0 0.0
    %146 = vmatpush.msra.mxu0 0.0
    %147 = vmatpush.msra.mxu0 0.0
    %148 = vmatpush.msra.mxu0 0.0
    %149 = vmatpush.msra.mxu0 0.0
    %150 = vmatpush.msra.mxu0 0.0
    %151 = vmatpush.msra.mxu0 0.0
    %152 = vmatpush.msra.mxu0 0.0
    %153 = vmatpush.msra.mxu0 0.0
    %154 = vmatpush.msra.mxu0 0.0
    %155 = vmatpush.msra.mxu0 %v131
    %156 = vmatpush.msra.mxu0 %v130
    %157 = vmatpush.msra.mxu0 %v129
    %158 = vmatpush.msra.mxu0 %v128
    %159 = vmatmul.f32.gmra.mxu0 %v138
    %v160 = vpop.f32.mrf.mxu0
    %v161 = vadd.f32 %v134, %v160
    %162 = vmatmul.f32.gmra.mxu0 %v141
    %v163 = vpop.f32.mrf.mxu0
    %v164 = vadd.f32 %v134, %v163
    %165 = vdwg.mxu0
    %v166 = vmax.f32 %v161, 0.0
    %v167 = vmax.f32 %v164, 0.0
    %v168 = vld [vmem:[#allocation3] sm:$0xff]
    %v169 = vld [vmem:[#allocation3 + $0x8] sm:$0xff]
    %v170 = vld [vmem:[%s5] sm:$0xff]
    %v171 = vld [vmem:[%s5 + $0x8] sm:$0xff]
    %v172 = vld [vmem:[%s5 + $0x10] sm:$0xff]
    %v173 = vld [vmem:[%s5 + $0x18] sm:$0xff]
    %v174 = vld [vmem:[%s5 + $0x20] sm:$0xff]
    %v175 = vld [vmem:[%s5 + $0x28] sm:$0xff]
    %v176 = vld [vmem:[%s5 + $0x30] sm:$0xff]
    %v177 = vld [vmem:[%s5 + $0x38] sm:$0xff]
    %vm178 = vcmask 523264
    %v180 = vsel %vm178, %v166, 0
    %v183 = vsel %vm178, %v167, 0
    %185 = vmatpush.msra.mxu0 0.0
    %186 = vmatpush.msra.mxu0 0.0
    %187 = vmatpush.msra.mxu0 0.0
    %188 = vmatpush.msra.mxu0 0.0
    %189 = vmatpush.msra.mxu0 0.0
    %190 = vmatpush.msra.mxu0 0.0
    %191 = vmatpush.msra.mxu0 0.0
    %192 = vmatpush.msra.mxu0 0.0
    %193 = vmatpush.msra.mxu0 %v177
    %194 = vmatpush.msra.mxu0 %v176
    %195 = vmatpush.msra.mxu0 %v175
    %196 = vmatpush.msra.mxu0 %v174
    %197 = vmatpush.msra.mxu0 %v173
    %198 = vmatpush.msra.mxu0 %v172
    %199 = vmatpush.msra.mxu0 %v171
    %200 = vmatpush.msra.mxu0 %v170
    %201 = vmatmul.f32.gmra.mxu0 %v180
    %v202 = vpop.f32.mrf.mxu0
    %v203 = vadd.f32 0.0, %v202
    %204 = vmatmul.f32.gmra.mxu0 %v183
    %v205 = vpop.f32.mrf.mxu0
    %v206 = vadd.f32 0.0, %v205
    %207 = vdwg.mxu0
    %v208 = vadd.f32 %v168, %v203
    %v209 = vadd.f32 %v169, %v206
    %210 = vst.msk [vmem:[#allocation3] sm:$0xff] %vm136, %v208
    %211 = vst.msk [vmem:[#allocation3 + $0x8] sm:$0xff] %vm136, %v209
    // Predicated region
    $region34: #{encoder_block_forward.5} parent=1 // pred_check
      %p212 = pneg %p27
    $region35: #{encoder_block_forward.5} parent=1 // pred_check_branch
      %214 = sbr.rel (%p212) target = $region37
    $region36: #{encoder_block_forward.5} parent=1 // pred_region
      %v215 = vld [vmem:[#allocation3] sm:$0xff]
      %v216 = vld [vmem:[#allocation3 + $0x8] sm:$0xff]
      %v217 = vld [vmem:[%s6] sm:$0x1]
      %v219 = vperm.slane %v217, 0
      %v221 = vadd.f32 %v215, %v219
      %v222 = vadd.f32 %v216, %v219
      %v223 = vld [vmem:[%s0] sm:$0xff]
      %v224 = vld [vmem:[%s0 + $0x8] sm:$0xff]
      %v225 = vadd.f32 %v221, %v223
      %v226 = vadd.f32 %v222, %v224
      %227 = vst.msk [vmem:[#allocation4] sm:$0xff] %vm136, %v225
      %228 = vst.msk [vmem:[#allocation4 + $0x8] sm:$0xff] %vm136, %v226
    $region37: #{encoder_block_forward.5} parent=1 // pred_fallthru
      _
    // Predicated region
    $region38: #{encoder_block_forward.5} parent=1 // pred_check
      _
    $region39: #{encoder_block_forward.5} parent=1 // pred_check_branch
      %230 = sbr.rel (0) target = $region41
    $region40: #{encoder_block_forward.5} parent=1 // pred_region
      %232 = vsyncadd [#allocation5], 0
      %s233 = sshll.u32 [#allocation4], 4
      %s234 = int_to_ptr.vmem [resolvable:$true] %s233
      %s235 = sshll.u32 %s7, 4
      %s236 = int_to_ptr.hbm [resolvable:$true] %s235
      %241 = dma.vmem_to_hbm [thread:$0]  %s234, 256, %s236, [#allocation5], 128, 128, 8
    $region41: #{encoder_block_forward.5} parent=1 // pred_fallthru
      _
    // Predicated region
    $region42: #{encoder_block_forward.5} parent=1 // pred_check
      _
    $region43: #{encoder_block_forward.5} parent=1 // pred_check_branch
      %243 = sbr.rel (0) target = $region45
    $region44: #{encoder_block_forward.5} parent=1 // pred_region
      %245 = dma.done [#allocation5], 256
    $region45: #{encoder_block_forward.5} parent=1 // pred_fallthru
      _
    %246 = vsyncpa [#allocation5], 1

</llo_original>
